<compile_context>
chip_gen: v6e
topology: v6e:2x2x1
jax: 0.10.0
libtpu: 0.0.40
codegen_flags: <defaults>
</compile_context>

<pallas_src>
import jax
import jax.numpy as jnp
from jax import lax
from jax.experimental import pallas as pl
from jax.experimental.pallas import tpu as pltpu


B_PAD = 8      # pad batch to a full sublane
C_PAD = 128    # lane-dense padded logits width (sliced back to num_class outside)
V_PAD_MULT = 128  # pad vocab to a lane multiple for the one-hot matmul


# ---------------------------------------------------------------------------
# Fused kernel: one-hot gather -> RNN layer 0 -> RNN layer 1 -> mean-pool -> FC
# ---------------------------------------------------------------------------

def fused_classifier_kernel(ids_ref,      # VMEM (S*B_PAD, 1) int32 token ids (t-major)
                            table0_ref,   # VMEM (V_PAD, H)  E @ Wih0^T + b0 (padded)
                            whh0_ref,     # VMEM (H, H)      Whh0^T
                            wih1_ref,     # VMEM (H, H)      Wih1^T
                            whh1_ref,     # VMEM (H, H)      Whh1^T
                            b1_ref,       # VMEM (1, H)      bih1 + bhh1
                            wfc_ref,      # VMEM (H, C_PAD)  Wfc^T, lane-padded
                            bfc_ref,      # VMEM (1, C_PAD)  bfc,  lane-padded
                            out_ref):     # VMEM (B_PAD, C_PAD) padded logits
    V_pad, H = table0_ref.shape
    B = out_ref.shape[0]          # B_PAD
    SB = ids_ref.shape[0]
    S = SB // B

    # ----- Embedding gather via a single one-hot MXU matmul. ---------------
    ids = ids_ref[...]                                               # (S*B, 1)
    vocab_iota = lax.broadcasted_iota(jnp.int32, (SB, V_pad), 1)     # (S*B, V_pad)
    onehot = (ids == vocab_iota).astype(jnp.float32)                 # (S*B, V_pad)
    x_all = jnp.dot(onehot, table0_ref[...],
                    preferred_element_type=jnp.float32)              # (S*B, H)

    whh0 = whh0_ref[...]
    wih1 = wih1_ref[...]
    whh1 = whh1_ref[...]
    b1 = b1_ref[...]

    # ----- Layer 0 recurrence (fully unrolled). Layer-1's input projection
    #       is computed per step here: it has no serial dependence, so the
    #       MXU hides it under the Whh0 chain and no concat is needed. ------
    h = jnp.zeros((B, H), jnp.float32)
    xp1 = []
    for t in range(S):
        x_t = x_all[t * B:(t + 1) * B, :]                            # static slice
        h = jnp.tanh(x_t + jnp.dot(h, whh0, preferred_element_type=jnp.float32))
        xp1.append(jnp.dot(h, wih1, preferred_element_type=jnp.float32) + b1)

    # ----- Layer 1 recurrence (fully unrolled) + on-the-fly mean-pool. -----
    h = jnp.zeros((B, H), jnp.float32)
    pooled = jnp.zeros((B, H), jnp.float32)
    for t in range(S):
        h = jnp.tanh(xp1[t] + jnp.dot(h, whh1, preferred_element_type=jnp.float32))
        pooled = pooled + h
    pooled = pooled * (1.0 / float(S))

    # ----- Backbone: linear head, lane-dense (C padded to 128) output. -----
    out_ref[...] = (jnp.dot(pooled, wfc_ref[...],
                            preferred_element_type=jnp.float32)
                    + bfc_ref[...])


# ---------------------------------------------------------------------------
# Wrapper
# ---------------------------------------------------------------------------

_VMEM = pl.BlockSpec(memory_space=pltpu.MemorySpace.VMEM)


def prepare_params(emb_table, rnn_params_raw, wfc, bfc):
    """Weight absorption / pre-transposition / padding done once at setup."""
    (wih0, whh0, bih0, bhh0), (wih1, whh1, bih1, bhh1) = rnn_params_raw
    H = whh0.shape[0]
    V = emb_table.shape[0]
    V_pad = ((V + V_PAD_MULT - 1) // V_PAD_MULT) * V_PAD_MULT

    # Absorb layer-0 input projection + combined bias into the embedding table.
    table0 = emb_table @ wih0.T + (bih0 + bhh0)[None, :]              # (V, H)
    table0_pad = jnp.zeros((V_pad, H), jnp.float32).at[:V, :].set(table0)

    b1 = (bih1 + bhh1).reshape(1, H)

    # Lane-pad the classification head to C_PAD output lanes.
    C = wfc.shape[0]
    wfc_pad_t = jnp.zeros((H, C_PAD), jnp.float32).at[:, :C].set(wfc.T)
    bfc_pad = jnp.zeros((1, C_PAD), jnp.float32).at[0, :C].set(bfc)

    return dict(table0=table0_pad, whh0_t=whh0.T, wih1_t=wih1.T, whh1_t=whh1.T,
                b1=b1, wfc_pad_t=wfc_pad_t, bfc_pad=bfc_pad, num_class=C)


def classifier_forward(token_ids, params):
    """token_ids: (S, B) int32 -> logits (B, num_class) f32."""
    S, B = token_ids.shape
    H = params["whh0_t"].shape[0]
    V_pad = params["table0"].shape[0]

    # Pad batch to a full sublane; padded rows use token id 0 and are sliced away.
    ids_pad = jnp.zeros((S, B_PAD), jnp.int32).at[:, :B].set(
        token_ids.astype(jnp.int32))
    ids_col = ids_pad.reshape(S * B_PAD, 1)

    flops = (2 * S * B_PAD * V_pad * H        # one-hot gather matmul
             + 2 * 2 * S * B_PAD * H * H      # two recurrences
             + 2 * S * B_PAD * H * H          # layer-1 input projection
             + 2 * B_PAD * H * C_PAD)         # head
    bytes_accessed = 4 * (S * B_PAD + V_pad * H + 3 * H * H + H
                          + H * C_PAD + C_PAD + B_PAD * C_PAD)

    logits_pad = pl.pallas_call(
        fused_classifier_kernel,
        out_shape=jax.ShapeDtypeStruct((B_PAD, C_PAD), jnp.float32),
        in_specs=[_VMEM] * 8,
        out_specs=_VMEM,
        cost_estimate=pl.CostEstimate(
            flops=flops,
            transcendentals=2 * S * B_PAD * H,   # tanh in both layers
            bytes_accessed=bytes_accessed),
    )(ids_col, params["table0"], params["whh0_t"], params["wih1_t"],
      params["whh1_t"], params["b1"], params["wfc_pad_t"], params["bfc_pad"])

    return logits_pad[:B, :params["num_class"]]


# ---------------------------------------------------------------------------
# Pure-JAX reference (nn.RNN + mean-pool + Linear semantics)
# ---------------------------------------------------------------------------

def reference_forward(token_ids, emb_table, rnn_params_raw, wfc, bfc):
    x = jnp.take(emb_table, token_ids, axis=0)                # (S, B, I)
    h_seq = x
    for (wih, whh, bih, bhh) in rnn_params_raw:
        S, B, _ = h_seq.shape
        H = whh.shape[0]
        h = jnp.zeros((B, H), jnp.float32)
        outs = []
        for t in range(S):
            h = jnp.tanh(h_seq[t] @ wih.T + bih + h @ whh.T + bhh)
            outs.append(h)
        h_seq = jnp.stack(outs, axis=0)
    pooled = h_seq.mean(axis=0)                               # (B, H)
    return pooled @ wfc.T + bfc                               # (B, C)


# ---------------------------------------------------------------------------
# Main
# ---------------------------------------------------------------------------

if __name__ == "__main__":
    vocab_size = 50
    input_size = 32      # embedding dim (frozen glove-style table, synthetic)
    hidden_size = 32
    num_layers = 2
    num_class = 5
    seq_len, batch = 8, 2

    keys = jax.random.split(jax.random.PRNGKey(0), 12)

    # Embedding table (frozen "glove" vectors, synthetic).
    emb_table = jax.random.normal(keys[0], (vocab_size, input_size),
                                  dtype=jnp.float32) * 0.1

    # RNN parameters, PyTorch-style uniform(-1/sqrt(H), 1/sqrt(H)) init.
    bound = 1.0 / float(hidden_size) ** 0.5
    rnn_params_raw = []
    for layer in range(num_layers):
        in_dim = input_size if layer == 0 else hidden_size
        kbase = 1 + 4 * layer
        wih = jax.random.uniform(keys[kbase + 0], (hidden_size, in_dim),
                                 minval=-bound, maxval=bound, dtype=jnp.float32)
        whh = jax.random.uniform(keys[kbase + 1], (hidden_size, hidden_size),
                                 minval=-bound, maxval=bound, dtype=jnp.float32)
        bih = jax.random.uniform(keys[kbase + 2], (hidden_size,),
                                 minval=-bound, maxval=bound, dtype=jnp.float32)
        bhh = jax.random.uniform(keys[kbase + 3], (hidden_size,),
                                 minval=-bound, maxval=bound, dtype=jnp.float32)
        rnn_params_raw.append((wih, whh, bih, bhh))

    # Backbone (classification head) parameters.
    fc_bound = 1.0 / float(hidden_size) ** 0.5
    wfc = jax.random.uniform(keys[9], (num_class, hidden_size),
                             minval=-fc_bound, maxval=fc_bound,
                             dtype=jnp.float32)
    bfc = jax.random.uniform(keys[10], (num_class,),
                             minval=-fc_bound, maxval=fc_bound,
                             dtype=jnp.float32)

    # Input: integer token ids, (seq, batch) — nn.RNN batch_first=False layout.
    token_ids = jax.random.randint(keys[11], (seq_len, batch), 0, vocab_size,
                                   dtype=jnp.int32)

    params = prepare_params(emb_table, rnn_params_raw, wfc, bfc)
    logits = classifier_forward(token_ids, params)
    logits = jax.block_until_ready(logits)
    assert logits.shape == (batch, num_class)

    ref = reference_forward(token_ids, emb_table, rnn_params_raw, wfc, bfc)
    ref = jax.block_until_ready(ref)
    assert jnp.allclose(logits, ref, atol=1e-3, rtol=1e-3), (logits, ref)

    print("KERNEL_OK")
</pallas_src>

<mosaic_0001>
module attributes {stable_mosaic.version = 11 : i64} {
  func.func @fused_classifier_kernel(%arg0: memref<64x1xi32, #tpu.memory_space<vmem>>, %arg1: memref<128x32xf32, #tpu.memory_space<vmem>>, %arg2: memref<32x32xf32, #tpu.memory_space<vmem>>, %arg3: memref<32x32xf32, #tpu.memory_space<vmem>>, %arg4: memref<32x32xf32, #tpu.memory_space<vmem>>, %arg5: memref<1x32xf32, #tpu.memory_space<vmem>>, %arg6: memref<32x128xf32, #tpu.memory_space<vmem>>, %arg7: memref<1x128xf32, #tpu.memory_space<vmem>>, %arg8: memref<8x128xf32, #tpu.memory_space<vmem>>) attributes {dimension_semantics = [], scalar_prefetch = 0 : i64, scratch_operands = 0 : i64, tpu.core_type = #tpu.core_type<tc>} {
    %c0 = arith.constant 0 : index
    %c0_0 = arith.constant 0 : index
    %0 = vector.load %arg0[%c0, %c0_0] : memref<64x1xi32, #tpu.memory_space<vmem>>, vector<64x1xi32>
    %1 = tpu.iota {dimensions = array<i32: 1>} : vector<64x128xi32>
    %2 = vector.broadcast %0 : vector<64x1xi32> to vector<64x128xi32>
    %3 = arith.cmpi eq, %2, %1 : vector<64x128xi32>
    %4 = arith.extui %3 : vector<64x128xi1> to vector<64x128xi32>
    %5 = arith.sitofp %4 : vector<64x128xi32> to vector<64x128xf32>
    %c0_1 = arith.constant 0 : index
    %c0_2 = arith.constant 0 : index
    %6 = vector.load %arg1[%c0_1, %c0_2] : memref<128x32xf32, #tpu.memory_space<vmem>>, vector<128x32xf32>
    %cst = arith.constant dense<0.000000e+00> : vector<64x32xf32>
    %7 = tpu.matmul %5, %6, %cst {dimension_numbers = #tpu.dot_dimension_numbers<[1], [0], [0], [1], [0, 0, 1, 1], [], []>} : vector<64x128xf32>, vector<128x32xf32>, vector<64x32xf32> -> vector<64x32xf32>
    %c0_3 = arith.constant 0 : index
    %c0_4 = arith.constant 0 : index
    %8 = vector.load %arg2[%c0_3, %c0_4] : memref<32x32xf32, #tpu.memory_space<vmem>>, vector<32x32xf32>
    %c0_5 = arith.constant 0 : index
    %c0_6 = arith.constant 0 : index
    %9 = vector.load %arg3[%c0_5, %c0_6] : memref<32x32xf32, #tpu.memory_space<vmem>>, vector<32x32xf32>
    %c0_7 = arith.constant 0 : index
    %c0_8 = arith.constant 0 : index
    %10 = vector.load %arg4[%c0_7, %c0_8] : memref<32x32xf32, #tpu.memory_space<vmem>>, vector<32x32xf32>
    %c0_9 = arith.constant 0 : index
    %c0_10 = arith.constant 0 : index
    %11 = vector.load %arg5[%c0_9, %c0_10] : memref<1x32xf32, #tpu.memory_space<vmem>>, vector<1x32xf32>
    %cst_11 = arith.constant 0.000000e+00 : f32
    %12 = vector.broadcast %cst_11 : f32 to vector<8x32xf32>
    %13 = vector.extract_strided_slice %7 {offsets = [0, 0], sizes = [8, 32], strides = [1, 1]} : vector<64x32xf32> to vector<8x32xf32>
    %cst_12 = arith.constant dense<0.000000e+00> : vector<8x32xf32>
    %14 = tpu.matmul %12, %8, %cst_12 {dimension_numbers = #tpu.dot_dimension_numbers<[1], [0], [0], [1], [0, 0, 1, 1], [], []>} : vector<8x32xf32>, vector<32x32xf32>, vector<8x32xf32> -> vector<8x32xf32>
    %15 = arith.addf %13, %14 : vector<8x32xf32>
    %16 = math.tanh %15 : vector<8x32xf32>
    %cst_13 = arith.constant dense<0.000000e+00> : vector<8x32xf32>
    %17 = tpu.matmul %16, %9, %cst_13 {dimension_numbers = #tpu.dot_dimension_numbers<[1], [0], [0], [1], [0, 0, 1, 1], [], []>} : vector<8x32xf32>, vector<32x32xf32>, vector<8x32xf32> -> vector<8x32xf32>
    %18 = vector.broadcast %11 : vector<1x32xf32> to vector<8x32xf32>
    %19 = arith.addf %17, %18 : vector<8x32xf32>
    %20 = vector.extract_strided_slice %7 {offsets = [8, 0], sizes = [8, 32], strides = [1, 1]} : vector<64x32xf32> to vector<8x32xf32>
    %cst_14 = arith.constant dense<0.000000e+00> : vector<8x32xf32>
    %21 = tpu.matmul %16, %8, %cst_14 {dimension_numbers = #tpu.dot_dimension_numbers<[1], [0], [0], [1], [0, 0, 1, 1], [], []>} : vector<8x32xf32>, vector<32x32xf32>, vector<8x32xf32> -> vector<8x32xf32>
    %22 = arith.addf %20, %21 : vector<8x32xf32>
    %23 = math.tanh %22 : vector<8x32xf32>
    %cst_15 = arith.constant dense<0.000000e+00> : vector<8x32xf32>
    %24 = tpu.matmul %23, %9, %cst_15 {dimension_numbers = #tpu.dot_dimension_numbers<[1], [0], [0], [1], [0, 0, 1, 1], [], []>} : vector<8x32xf32>, vector<32x32xf32>, vector<8x32xf32> -> vector<8x32xf32>
    %25 = vector.broadcast %11 : vector<1x32xf32> to vector<8x32xf32>
    %26 = arith.addf %24, %25 : vector<8x32xf32>
    %27 = vector.extract_strided_slice %7 {offsets = [16, 0], sizes = [8, 32], strides = [1, 1]} : vector<64x32xf32> to vector<8x32xf32>
    %cst_16 = arith.constant dense<0.000000e+00> : vector<8x32xf32>
    %28 = tpu.matmul %23, %8, %cst_16 {dimension_numbers = #tpu.dot_dimension_numbers<[1], [0], [0], [1], [0, 0, 1, 1], [], []>} : vector<8x32xf32>, vector<32x32xf32>, vector<8x32xf32> -> vector<8x32xf32>
    %29 = arith.addf %27, %28 : vector<8x32xf32>
    %30 = math.tanh %29 : vector<8x32xf32>
    %cst_17 = arith.constant dense<0.000000e+00> : vector<8x32xf32>
    %31 = tpu.matmul %30, %9, %cst_17 {dimension_numbers = #tpu.dot_dimension_numbers<[1], [0], [0], [1], [0, 0, 1, 1], [], []>} : vector<8x32xf32>, vector<32x32xf32>, vector<8x32xf32> -> vector<8x32xf32>
    %32 = vector.broadcast %11 : vector<1x32xf32> to vector<8x32xf32>
    %33 = arith.addf %31, %32 : vector<8x32xf32>
    %34 = vector.extract_strided_slice %7 {offsets = [24, 0], sizes = [8, 32], strides = [1, 1]} : vector<64x32xf32> to vector<8x32xf32>
    %cst_18 = arith.constant dense<0.000000e+00> : vector<8x32xf32>
    %35 = tpu.matmul %30, %8, %cst_18 {dimension_numbers = #tpu.dot_dimension_numbers<[1], [0], [0], [1], [0, 0, 1, 1], [], []>} : vector<8x32xf32>, vector<32x32xf32>, vector<8x32xf32> -> vector<8x32xf32>
    %36 = arith.addf %34, %35 : vector<8x32xf32>
    %37 = math.tanh %36 : vector<8x32xf32>
    %cst_19 = arith.constant dense<0.000000e+00> : vector<8x32xf32>
    %38 = tpu.matmul %37, %9, %cst_19 {dimension_numbers = #tpu.dot_dimension_numbers<[1], [0], [0], [1], [0, 0, 1, 1], [], []>} : vector<8x32xf32>, vector<32x32xf32>, vector<8x32xf32> -> vector<8x32xf32>
    %39 = vector.broadcast %11 : vector<1x32xf32> to vector<8x32xf32>
    %40 = arith.addf %38, %39 : vector<8x32xf32>
    %41 = vector.extract_strided_slice %7 {offsets = [32, 0], sizes = [8, 32], strides = [1, 1]} : vector<64x32xf32> to vector<8x32xf32>
    %cst_20 = arith.constant dense<0.000000e+00> : vector<8x32xf32>
    %42 = tpu.matmul %37, %8, %cst_20 {dimension_numbers = #tpu.dot_dimension_numbers<[1], [0], [0], [1], [0, 0, 1, 1], [], []>} : vector<8x32xf32>, vector<32x32xf32>, vector<8x32xf32> -> vector<8x32xf32>
    %43 = arith.addf %41, %42 : vector<8x32xf32>
    %44 = math.tanh %43 : vector<8x32xf32>
    %cst_21 = arith.constant dense<0.000000e+00> : vector<8x32xf32>
    %45 = tpu.matmul %44, %9, %cst_21 {dimension_numbers = #tpu.dot_dimension_numbers<[1], [0], [0], [1], [0, 0, 1, 1], [], []>} : vector<8x32xf32>, vector<32x32xf32>, vector<8x32xf32> -> vector<8x32xf32>
    %46 = vector.broadcast %11 : vector<1x32xf32> to vector<8x32xf32>
    %47 = arith.addf %45, %46 : vector<8x32xf32>
    %48 = vector.extract_strided_slice %7 {offsets = [40, 0], sizes = [8, 32], strides = [1, 1]} : vector<64x32xf32> to vector<8x32xf32>
    %cst_22 = arith.constant dense<0.000000e+00> : vector<8x32xf32>
    %49 = tpu.matmul %44, %8, %cst_22 {dimension_numbers = #tpu.dot_dimension_numbers<[1], [0], [0], [1], [0, 0, 1, 1], [], []>} : vector<8x32xf32>, vector<32x32xf32>, vector<8x32xf32> -> vector<8x32xf32>
    %50 = arith.addf %48, %49 : vector<8x32xf32>
    %51 = math.tanh %50 : vector<8x32xf32>
    %cst_23 = arith.constant dense<0.000000e+00> : vector<8x32xf32>
    %52 = tpu.matmul %51, %9, %cst_23 {dimension_numbers = #tpu.dot_dimension_numbers<[1], [0], [0], [1], [0, 0, 1, 1], [], []>} : vector<8x32xf32>, vector<32x32xf32>, vector<8x32xf32> -> vector<8x32xf32>
    %53 = vector.broadcast %11 : vector<1x32xf32> to vector<8x32xf32>
    %54 = arith.addf %52, %53 : vector<8x32xf32>
    %55 = vector.extract_strided_slice %7 {offsets = [48, 0], sizes = [8, 32], strides = [1, 1]} : vector<64x32xf32> to vector<8x32xf32>
    %cst_24 = arith.constant dense<0.000000e+00> : vector<8x32xf32>
    %56 = tpu.matmul %51, %8, %cst_24 {dimension_numbers = #tpu.dot_dimension_numbers<[1], [0], [0], [1], [0, 0, 1, 1], [], []>} : vector<8x32xf32>, vector<32x32xf32>, vector<8x32xf32> -> vector<8x32xf32>
    %57 = arith.addf %55, %56 : vector<8x32xf32>
    %58 = math.tanh %57 : vector<8x32xf32>
    %cst_25 = arith.constant dense<0.000000e+00> : vector<8x32xf32>
    %59 = tpu.matmul %58, %9, %cst_25 {dimension_numbers = #tpu.dot_dimension_numbers<[1], [0], [0], [1], [0, 0, 1, 1], [], []>} : vector<8x32xf32>, vector<32x32xf32>, vector<8x32xf32> -> vector<8x32xf32>
    %60 = vector.broadcast %11 : vector<1x32xf32> to vector<8x32xf32>
    %61 = arith.addf %59, %60 : vector<8x32xf32>
    %62 = vector.extract_strided_slice %7 {offsets = [56, 0], sizes = [8, 32], strides = [1, 1]} : vector<64x32xf32> to vector<8x32xf32>
    %cst_26 = arith.constant dense<0.000000e+00> : vector<8x32xf32>
    %63 = tpu.matmul %58, %8, %cst_26 {dimension_numbers = #tpu.dot_dimension_numbers<[1], [0], [0], [1], [0, 0, 1, 1], [], []>} : vector<8x32xf32>, vector<32x32xf32>, vector<8x32xf32> -> vector<8x32xf32>
    %64 = arith.addf %62, %63 : vector<8x32xf32>
    %65 = math.tanh %64 : vector<8x32xf32>
    %cst_27 = arith.constant dense<0.000000e+00> : vector<8x32xf32>
    %66 = tpu.matmul %65, %9, %cst_27 {dimension_numbers = #tpu.dot_dimension_numbers<[1], [0], [0], [1], [0, 0, 1, 1], [], []>} : vector<8x32xf32>, vector<32x32xf32>, vector<8x32xf32> -> vector<8x32xf32>
    %67 = vector.broadcast %11 : vector<1x32xf32> to vector<8x32xf32>
    %68 = arith.addf %66, %67 : vector<8x32xf32>
    %cst_28 = arith.constant 0.000000e+00 : f32
    %69 = vector.broadcast %cst_28 : f32 to vector<8x32xf32>
    %cst_29 = arith.constant 0.000000e+00 : f32
    %70 = vector.broadcast %cst_29 : f32 to vector<8x32xf32>
    %cst_30 = arith.constant dense<0.000000e+00> : vector<8x32xf32>
    %71 = tpu.matmul %69, %10, %cst_30 {dimension_numbers = #tpu.dot_dimension_numbers<[1], [0], [0], [1], [0, 0, 1, 1], [], []>} : vector<8x32xf32>, vector<32x32xf32>, vector<8x32xf32> -> vector<8x32xf32>
    %72 = arith.addf %19, %71 : vector<8x32xf32>
    %73 = math.tanh %72 : vector<8x32xf32>
    %74 = arith.addf %70, %73 : vector<8x32xf32>
    %cst_31 = arith.constant dense<0.000000e+00> : vector<8x32xf32>
    %75 = tpu.matmul %73, %10, %cst_31 {dimension_numbers = #tpu.dot_dimension_numbers<[1], [0], [0], [1], [0, 0, 1, 1], [], []>} : vector<8x32xf32>, vector<32x32xf32>, vector<8x32xf32> -> vector<8x32xf32>
    %76 = arith.addf %26, %75 : vector<8x32xf32>
    %77 = math.tanh %76 : vector<8x32xf32>
    %78 = arith.addf %74, %77 : vector<8x32xf32>
    %cst_32 = arith.constant dense<0.000000e+00> : vector<8x32xf32>
    %79 = tpu.matmul %77, %10, %cst_32 {dimension_numbers = #tpu.dot_dimension_numbers<[1], [0], [0], [1], [0, 0, 1, 1], [], []>} : vector<8x32xf32>, vector<32x32xf32>, vector<8x32xf32> -> vector<8x32xf32>
    %80 = arith.addf %33, %79 : vector<8x32xf32>
    %81 = math.tanh %80 : vector<8x32xf32>
    %82 = arith.addf %78, %81 : vector<8x32xf32>
    %cst_33 = arith.constant dense<0.000000e+00> : vector<8x32xf32>
    %83 = tpu.matmul %81, %10, %cst_33 {dimension_numbers = #tpu.dot_dimension_numbers<[1], [0], [0], [1], [0, 0, 1, 1], [], []>} : vector<8x32xf32>, vector<32x32xf32>, vector<8x32xf32> -> vector<8x32xf32>
    %84 = arith.addf %40, %83 : vector<8x32xf32>
    %85 = math.tanh %84 : vector<8x32xf32>
    %86 = arith.addf %82, %85 : vector<8x32xf32>
    %cst_34 = arith.constant dense<0.000000e+00> : vector<8x32xf32>
    %87 = tpu.matmul %85, %10, %cst_34 {dimension_numbers = #tpu.dot_dimension_numbers<[1], [0], [0], [1], [0, 0, 1, 1], [], []>} : vector<8x32xf32>, vector<32x32xf32>, vector<8x32xf32> -> vector<8x32xf32>
    %88 = arith.addf %47, %87 : vector<8x32xf32>
    %89 = math.tanh %88 : vector<8x32xf32>
    %90 = arith.addf %86, %89 : vector<8x32xf32>
    %cst_35 = arith.constant dense<0.000000e+00> : vector<8x32xf32>
    %91 = tpu.matmul %89, %10, %cst_35 {dimension_numbers = #tpu.dot_dimension_numbers<[1], [0], [0], [1], [0, 0, 1, 1], [], []>} : vector<8x32xf32>, vector<32x32xf32>, vector<8x32xf32> -> vector<8x32xf32>
    %92 = arith.addf %54, %91 : vector<8x32xf32>
    %93 = math.tanh %92 : vector<8x32xf32>
    %94 = arith.addf %90, %93 : vector<8x32xf32>
    %cst_36 = arith.constant dense<0.000000e+00> : vector<8x32xf32>
    %95 = tpu.matmul %93, %10, %cst_36 {dimension_numbers = #tpu.dot_dimension_numbers<[1], [0], [0], [1], [0, 0, 1, 1], [], []>} : vector<8x32xf32>, vector<32x32xf32>, vector<8x32xf32> -> vector<8x32xf32>
    %96 = arith.addf %61, %95 : vector<8x32xf32>
    %97 = math.tanh %96 : vector<8x32xf32>
    %98 = arith.addf %94, %97 : vector<8x32xf32>
    %cst_37 = arith.constant dense<0.000000e+00> : vector<8x32xf32>
    %99 = tpu.matmul %97, %10, %cst_37 {dimension_numbers = #tpu.dot_dimension_numbers<[1], [0], [0], [1], [0, 0, 1, 1], [], []>} : vector<8x32xf32>, vector<32x32xf32>, vector<8x32xf32> -> vector<8x32xf32>
    %100 = arith.addf %68, %99 : vector<8x32xf32>
    %101 = math.tanh %100 : vector<8x32xf32>
    %102 = arith.addf %98, %101 : vector<8x32xf32>
    %cst_38 = arith.constant 1.250000e-01 : f32
    %103 = vector.broadcast %cst_38 : f32 to vector<8x32xf32>
    %104 = arith.mulf %102, %103 : vector<8x32xf32>
    %c0_39 = arith.constant 0 : index
    %c0_40 = arith.constant 0 : index
    %105 = vector.load %arg6[%c0_39, %c0_40] : memref<32x128xf32, #tpu.memory_space<vmem>>, vector<32x128xf32>
    %cst_41 = arith.constant dense<0.000000e+00> : vector<8x128xf32>
    %106 = tpu.matmul %104, %105, %cst_41 {dimension_numbers = #tpu.dot_dimension_numbers<[1], [0], [0], [1], [0, 0, 1, 1], [], []>} : vector<8x32xf32>, vector<32x128xf32>, vector<8x128xf32> -> vector<8x128xf32>
    %c0_42 = arith.constant 0 : index
    %c0_43 = arith.constant 0 : index
    %107 = vector.load %arg7[%c0_42, %c0_43] : memref<1x128xf32, #tpu.memory_space<vmem>>, vector<1x128xf32>
    %108 = vector.broadcast %107 : vector<1x128xf32> to vector<8x128xf32>
    %109 = arith.addf %106, %108 : vector<8x128xf32>
    %c0_44 = arith.constant 0 : index
    %c0_45 = arith.constant 0 : index
    %110 = vector.load %arg8[%c0_44, %c0_45] : memref<8x128xf32, #tpu.memory_space<vmem>>, vector<8x128xf32>
    tpu.vector_store %arg8[%c0_44, %c0_45], %109 {strides = array<i32>} : memref<8x128xf32, #tpu.memory_space<vmem>>, vector<8x128xf32>,
    return
  }
}

</mosaic_0001>

<llo_original>
// kernel: tpu_custom_call.1
$region0: #{tpu_custom_call.1}
  #allocation0 [shape = 'u32[]', space=smem, size = 0x4, offset = 0x4, fixed_abs, tag = 'smem constant byte address 0x4 - core index']
  #allocation1 [shape = 'u32[144,128]{1,0:T(1,128)}', space=vmem, size = 0x12000, scoped, tag = 'internal scratch']
  %s0 = inlined_call_operand.vmem [shape: s32[64,1], index: 0, kind: input, shape index: {}]
  %s1 = inlined_call_operand.vmem [shape: f32[128,32], index: 1, kind: input, shape index: {}]
  %s2 = inlined_call_operand.vmem [shape: f32[32,32], index: 2, kind: input, shape index: {}]
  %s3 = inlined_call_operand.vmem [shape: f32[32,32], index: 3, kind: input, shape index: {}]
  %s4 = inlined_call_operand.vmem [shape: f32[32,32], index: 4, kind: input, shape index: {}]
  %s5 = inlined_call_operand.vmem [shape: f32[1,32], index: 5, kind: input, shape index: {}]
  %s6 = inlined_call_operand.vmem [shape: f32[32,128], index: 6, kind: input, shape index: {}]
  %s7 = inlined_call_operand.vmem [shape: f32[1,128], index: 7, kind: input, shape index: {}]
  %s8 = inlined_call_operand.hbm [shape: f32[8,128], index: 8, kind: output, shape index: {}]
  %s9 = sld [smem:[#allocation0]]
  $region42: #{tpu_custom_call.1} parent=0
    _
  %s11 = ssub.s32 1, %s9
  %s12 = scalar_select 0, %s11, %s9
  $region1: #{tpu_custom_call.1} parent=0
    #allocation2 [shape = 'u8[4096]{0}', space=vmem, size = 0x1000, scoped, tag = 'output window, operand 0, single buffered']
    #allocation3 [shape = 's32[1]{0}', space=sflag, size = 0x4, scoped, tag = 'scoped memory for tpu_custom_call.1']
    %13 = vsyncpa [#allocation3], 0
    // Predicated region
    $region2: #{tpu_custom_call.1} parent=1 // pred_check
      _
    $region3: #{tpu_custom_call.1} parent=1 // pred_check_branch
      %15 = sbr.rel (0) target = $region5
    $region4: #{tpu_custom_call.1} parent=1 // pred_region
      _
    $region5: #{tpu_custom_call.1} parent=1 // pred_fallthru
      _
    // Predicated region
    $region6: #{tpu_custom_call.1} parent=1 // pred_check
      _
    $region7: #{tpu_custom_call.1} parent=1 // pred_check_branch
      %17 = sbr.rel (0) target = $region9
    $region8: #{tpu_custom_call.1} parent=1 // pred_region
      _
    $region9: #{tpu_custom_call.1} parent=1 // pred_fallthru
      _
    // Predicated region
    $region10: #{tpu_custom_call.1} parent=1 // pred_check
      _
    $region11: #{tpu_custom_call.1} parent=1 // pred_check_branch
      %19 = sbr.rel (0) target = $region13
    $region12: #{tpu_custom_call.1} parent=1 // pred_region
      _
    $region13: #{tpu_custom_call.1} parent=1 // pred_fallthru
      _
    // Predicated region
    $region14: #{tpu_custom_call.1} parent=1 // pred_check
      _
    $region15: #{tpu_custom_call.1} parent=1 // pred_check_branch
      %21 = sbr.rel (0) target = $region17
    $region16: #{tpu_custom_call.1} parent=1 // pred_region
      _
    $region17: #{tpu_custom_call.1} parent=1 // pred_fallthru
      _
    // Predicated region
    $region18: #{tpu_custom_call.1} parent=1 // pred_check
      _
    $region19: #{tpu_custom_call.1} parent=1 // pred_check_branch
      %23 = sbr.rel (0) target = $region21
    $region20: #{tpu_custom_call.1} parent=1 // pred_region
      _
    $region21: #{tpu_custom_call.1} parent=1 // pred_fallthru
      _
    // Predicated region
    $region22: #{tpu_custom_call.1} parent=1 // pred_check
      _
    $region23: #{tpu_custom_call.1} parent=1 // pred_check_branch
      %25 = sbr.rel (0) target = $region25
    $region24: #{tpu_custom_call.1} parent=1 // pred_region
      _
    $region25: #{tpu_custom_call.1} parent=1 // pred_fallthru
      _
    // Predicated region
    $region26: #{tpu_custom_call.1} parent=1 // pred_check
      _
    $region27: #{tpu_custom_call.1} parent=1 // pred_check_branch
      %27 = sbr.rel (0) target = $region29
    $region28: #{tpu_custom_call.1} parent=1 // pred_region
      _
    $region29: #{tpu_custom_call.1} parent=1 // pred_fallthru
      _
    // Predicated region
    $region30: #{tpu_custom_call.1} parent=1 // pred_check
      _
    $region31: #{tpu_custom_call.1} parent=1 // pred_check_branch
      %29 = sbr.rel (0) target = $region33
    $region32: #{tpu_custom_call.1} parent=1 // pred_region
      _
    $region33: #{tpu_custom_call.1} parent=1 // pred_fallthru
      _
    %v30 = vld [vmem:[%s0] sm:$0xff]
    %v31 = vld [vmem:[%s0 + $0x8] sm:$0xff]
    %v32 = vld [vmem:[%s0 + $0x10] sm:$0xff]
    %v33 = vld [vmem:[%s0 + $0x18] sm:$0xff]
    %v34 = vld [vmem:[%s0 + $0x20] sm:$0xff]
    %v35 = vld [vmem:[%s0 + $0x28] sm:$0xff]
    %v36 = vld [vmem:[%s0 + $0x30] sm:$0xff]
    %v37 = vld [vmem:[%s0 + $0x38] sm:$0xff]
    %v38 = vlaneseq
    %v39 = vand.u32 %v38, 127
    %40 = vset.pattern.permute.xlu0 0
    %41 = vperm.xlu0 %40, %v30
    %v42 = vpop.permute.xlu0 %41
    %43 = vset.pattern.permute.xlu0 0
    %44 = vperm.xlu0 %43, %v31
    %v45 = vpop.permute.xlu0 %44
    %46 = vset.pattern.permute.xlu0 0
    %47 = vperm.xlu0 %46, %v32
    %v48 = vpop.permute.xlu0 %47
    %49 = vset.pattern.permute.xlu0 0
    %50 = vperm.xlu0 %49, %v33
    %v51 = vpop.permute.xlu0 %50
    %52 = vset.pattern.permute.xlu0 0
    %53 = vperm.xlu0 %52, %v34
    %v54 = vpop.permute.xlu0 %53
    %55 = vset.pattern.permute.xlu0 0
    %56 = vperm.xlu0 %55, %v35
    %v57 = vpop.permute.xlu0 %56
    %58 = vset.pattern.permute.xlu0 0
    %59 = vperm.xlu0 %58, %v36
    %v60 = vpop.permute.xlu0 %59
    %61 = vset.pattern.permute.xlu0 0
    %62 = vperm.xlu0 %61, %v37
    %v63 = vpop.permute.xlu0 %62
    %vm64 = vcmp.eq.s32.totalorder %v42, %v39
    %vm65 = vcmp.eq.s32.totalorder %v45, %v39
    %vm66 = vcmp.eq.s32.totalorder %v48, %v39
    %vm67 = vcmp.eq.s32.totalorder %v51, %v39
    %vm68 = vcmp.eq.s32.totalorder %v54, %v39
    %vm69 = vcmp.eq.s32.totalorder %v57, %v39
    %vm70 = vcmp.eq.s32.totalorder %v60, %v39
    %vm71 = vcmp.eq.s32.totalorder %v63, %v39
    %v72 = vsel %vm64, 1, 0
    %v73 = vsel %vm65, 1, 0
    %v74 = vsel %vm66, 1, 0
    %v75 = vsel %vm67, 1, 0
    %v76 = vsel %vm68, 1, 0
    %v77 = vsel %vm69, 1, 0
    %v78 = vsel %vm70, 1, 0
    %v79 = vsel %vm71, 1, 0
    %v80 = vcvt.s32.f32 %v72
    %v81 = vcvt.s32.f32 %v73
    %v82 = vcvt.s32.f32 %v74
    %v83 = vcvt.s32.f32 %v75
    %v84 = vcvt.s32.f32 %v76
    %v85 = vcvt.s32.f32 %v77
    %v86 = vcvt.s32.f32 %v78
    %v87 = vcvt.s32.f32 %v79
    %v88 = vld [vmem:[%s1] sm:$0xff]
    %v89 = vld [vmem:[%s1 + $0x8] sm:$0xff]
    %v90 = vld [vmem:[%s1 + $0x10] sm:$0xff]
    %v91 = vld [vmem:[%s1 + $0x18] sm:$0xff]
    %v92 = vld [vmem:[%s1 + $0x20] sm:$0xff]
    %v93 = vld [vmem:[%s1 + $0x28] sm:$0xff]
    %v94 = vld [vmem:[%s1 + $0x30] sm:$0xff]
    %v95 = vld [vmem:[%s1 + $0x38] sm:$0xff]
    %v96 = vld [vmem:[%s1 + $0x40] sm:$0xff]
    %v97 = vld [vmem:[%s1 + $0x48] sm:$0xff]
    %v98 = vld [vmem:[%s1 + $0x50] sm:$0xff]
    %v99 = vld [vmem:[%s1 + $0x58] sm:$0xff]
    %v100 = vld [vmem:[%s1 + $0x60] sm:$0xff]
    %v101 = vld [vmem:[%s1 + $0x68] sm:$0xff]
    %v102 = vld [vmem:[%s1 + $0x70] sm:$0xff]
    %v103 = vld [vmem:[%s1 + $0x78] sm:$0xff]
    %104 = vmatprep.subr.mxu0 0.0
    %105 = vmatpush1.msra.mxu0 %v103
    %106 = vmatprep.subr.mxu0 0.0
    %107 = vmatpush1.msra.mxu0 %v102
    %108 = vmatprep.subr.mxu0 0.0
    %109 = vmatpush1.msra.mxu0 %v101
    %110 = vmatprep.subr.mxu0 0.0
    %111 = vmatpush1.msra.mxu0 %v100
    %112 = vmatprep.subr.mxu0 0.0
    %113 = vmatpush1.msra.mxu0 %v99
    %114 = vmatprep.subr.mxu0 0.0
    %115 = vmatpush1.msra.mxu0 %v98
    %116 = vmatprep.subr.mxu0 0.0
    %117 = vmatpush1.msra.mxu0 %v97
    %118 = vmatprep.subr.mxu0 0.0
    %119 = vmatpush1.msra.mxu0 %v96
    %120 = vmatprep.subr.mxu0 0.0
    %121 = vmatpush1.msra.mxu0 %v95
    %122 = vmatprep.subr.mxu0 0.0
    %123 = vmatpush1.msra.mxu0 %v94
    %124 = vmatprep.subr.mxu0 0.0
    %125 = vmatpush1.msra.mxu0 %v93
    %126 = vmatprep.subr.mxu0 0.0
    %127 = vmatpush1.msra.mxu0 %v92
    %128 = vmatprep.subr.mxu0 0.0
    %129 = vmatpush1.msra.mxu0 %v91
    %130 = vmatprep.subr.mxu0 0.0
    %131 = vmatpush1.msra.mxu0 %v90
    %132 = vmatprep.subr.mxu0 0.0
    %133 = vmatpush1.msra.mxu0 %v89
    %134 = vmatprep.subr.mxu0 0.0
    %135 = vmatpush1.msra.mxu0 %v88
    %136 = vmatprep.subr.mxu0 0.0
    %137 = vmatpush2.msra.mxu0 0.0
    %138 = vmatprep.subr.mxu0 0.0
    %139 = vmatpush2.msra.mxu0 0.0
    %140 = vmatprep.subr.mxu0 0.0
    %141 = vmatpush2.msra.mxu0 0.0
    %142 = vmatprep.subr.mxu0 0.0
    %143 = vmatpush2.msra.mxu0 0.0
    %144 = vmatprep.subr.mxu0 0.0
    %145 = vmatpush2.msra.mxu0 0.0
    %146 = vmatprep.subr.mxu0 0.0
    %147 = vmatpush2.msra.mxu0 0.0
    %148 = vmatprep.subr.mxu0 0.0
    %149 = vmatpush2.msra.mxu0 0.0
    %150 = vmatprep.subr.mxu0 0.0
    %151 = vmatpush2.msra.mxu0 0.0
    %152 = vmatprep.subr.mxu0 0.0
    %153 = vmatpush2.msra.mxu0 0.0
    %154 = vmatprep.subr.mxu0 0.0
    %155 = vmatpush2.msra.mxu0 0.0
    %156 = vmatprep.subr.mxu0 0.0
    %157 = vmatpush2.msra.mxu0 0.0
    %158 = vmatprep.subr.mxu0 0.0
    %159 = vmatpush2.msra.mxu0 0.0
    %160 = vmatprep.subr.mxu0 0.0
    %161 = vmatpush2.msra.mxu0 0.0
    %162 = vmatprep.subr.mxu0 0.0
    %163 = vmatpush2.msra.mxu0 0.0
    %164 = vmatprep.subr.mxu0 0.0
    %165 = vmatpush2.msra.mxu0 0.0
    %166 = vmatprep.subr.mxu0 0.0
    %167 = vmatpush2.msra.mxu0 0.0
    %168 = vmatprep.mubr.f32.mxu0 0.0
    %169 = vmatmul.mubr.f32.gmra.mxu0 %v80
    %v170 = vpop.f32.mrf.mxu0
    %v171 = vadd.f32 0.0, %v170
    %v172 = vpop.f32.mrf.mxu0
    %173 = vmatprep.mubr.f32.mxu0 0.0
    %174 = vmatmul.mubr.f32.gmra.mxu0 %v81
    %v175 = vpop.f32.mrf.mxu0
    %v176 = vadd.f32 0.0, %v175
    %v177 = vpop.f32.mrf.mxu0
    %178 = vmatprep.mubr.f32.mxu0 0.0
    %179 = vmatmul.mubr.f32.gmra.mxu0 %v82
    %v180 = vpop.f32.mrf.mxu0
    %v181 = vadd.f32 0.0, %v180
    %v182 = vpop.f32.mrf.mxu0
    %183 = vmatprep.mubr.f32.mxu0 0.0
    %184 = vmatmul.mubr.f32.gmra.mxu0 %v83
    %v185 = vpop.f32.mrf.mxu0
    %v186 = vadd.f32 0.0, %v185
    %v187 = vpop.f32.mrf.mxu0
    %188 = vmatprep.mubr.f32.mxu0 0.0
    %189 = vmatmul.mubr.f32.gmra.mxu0 %v84
    %v190 = vpop.f32.mrf.mxu0
    %v191 = vadd.f32 0.0, %v190
    %v192 = vpop.f32.mrf.mxu0
    %193 = vmatprep.mubr.f32.mxu0 0.0
    %194 = vmatmul.mubr.f32.gmra.mxu0 %v85
    %v195 = vpop.f32.mrf.mxu0
    %v196 = vadd.f32 0.0, %v195
    %v197 = vpop.f32.mrf.mxu0
    %198 = vmatprep.mubr.f32.mxu0 0.0
    %199 = vmatmul.mubr.f32.gmra.mxu0 %v86
    %v200 = vpop.f32.mrf.mxu0
    %v201 = vadd.f32 0.0, %v200
    %v202 = vpop.f32.mrf.mxu0
    %203 = vmatprep.mubr.f32.mxu0 0.0
    %204 = vmatmul.mubr.f32.gmra.mxu0 %v87
    %v205 = vpop.f32.mrf.mxu0
    %v206 = vadd.f32 0.0, %v205
    %v207 = vpop.f32.mrf.mxu0
    %208 = vdwg.mxu0
    %v209 = vld [vmem:[%s2] sm:$0xff]
    %v210 = vld [vmem:[%s2 + $0x8] sm:$0xff]
    %v211 = vld [vmem:[%s2 + $0x10] sm:$0xff]
    %v212 = vld [vmem:[%s2 + $0x18] sm:$0xff]
    %v213 = vld [vmem:[%s3] sm:$0xff]
    %v214 = vld [vmem:[%s3 + $0x8] sm:$0xff]
    %v215 = vld [vmem:[%s3 + $0x10] sm:$0xff]
    %v216 = vld [vmem:[%s3 + $0x18] sm:$0xff]
    %v217 = vld [vmem:[%s4] sm:$0xff]
    %v218 = vld [vmem:[%s4 + $0x8] sm:$0xff]
    %v219 = vld [vmem:[%s4 + $0x10] sm:$0xff]
    %v220 = vld [vmem:[%s4 + $0x18] sm:$0xff]
    %v221 = vld [vmem:[%s5] sm:$0x1]
    %vm222 = vcmask 261120
    %v224 = vsel %vm222, 0.0, 0
    %226 = vmatprep.subr.mxu0 0.0
    %227 = vmatpush1.msra.mxu0 0.0
    %228 = vmatprep.subr.mxu0 0.0
    %229 = vmatpush1.msra.mxu0 0.0
    %230 = vmatprep.subr.mxu0 0.0
    %231 = vmatpush1.msra.mxu0 0.0
    %232 = vmatprep.subr.mxu0 0.0
    %233 = vmatpush1.msra.mxu0 0.0
    %234 = vmatprep.subr.mxu0 0.0
    %235 = vmatpush1.msra.mxu0 0.0
    %236 = vmatprep.subr.mxu0 0.0
    %237 = vmatpush1.msra.mxu0 0.0
    %238 = vmatprep.subr.mxu0 0.0
    %239 = vmatpush1.msra.mxu0 0.0
    %240 = vmatprep.subr.mxu0 0.0
    %241 = vmatpush1.msra.mxu0 0.0
    %242 = vmatprep.subr.mxu0 0.0
    %243 = vmatpush1.msra.mxu0 0.0
    %244 = vmatprep.subr.mxu0 0.0
    %245 = vmatpush1.msra.mxu0 0.0
    %246 = vmatprep.subr.mxu0 0.0
    %247 = vmatpush1.msra.mxu0 0.0
    %248 = vmatprep.subr.mxu0 0.0
    %249 = vmatpush1.msra.mxu0 0.0
    %250 = vmatprep.subr.mxu0 0.0
    %251 = vmatpush1.msra.mxu0 %v212
    %252 = vmatprep.subr.mxu0 0.0
    %253 = vmatpush1.msra.mxu0 %v211
    %254 = vmatprep.subr.mxu0 0.0
    %255 = vmatpush1.msra.mxu0 %v210
    %256 = vmatprep.subr.mxu0 0.0
    %257 = vmatpush1.msra.mxu0 %v209
    %258 = vmatprep.subr.mxu0 0.0
    %259 = vmatpush2.msra.mxu0 0.0
    %260 = vmatprep.subr.mxu0 0.0
    %261 = vmatpush2.msra.mxu0 0.0
    %262 = vmatprep.subr.mxu0 0.0
    %263 = vmatpush2.msra.mxu0 0.0
    %264 = vmatprep.subr.mxu0 0.0
    %265 = vmatpush2.msra.mxu0 0.0
    %266 = vmatprep.subr.mxu0 0.0
    %267 = vmatpush2.msra.mxu0 0.0
    %268 = vmatprep.subr.mxu0 0.0
    %269 = vmatpush2.msra.mxu0 0.0
    %270 = vmatprep.subr.mxu0 0.0
    %271 = vmatpush2.msra.mxu0 0.0
    %272 = vmatprep.subr.mxu0 0.0
    %273 = vmatpush2.msra.mxu0 0.0
    %274 = vmatprep.subr.mxu0 0.0
    %275 = vmatpush2.msra.mxu0 0.0
    %276 = vmatprep.subr.mxu0 0.0
    %277 = vmatpush2.msra.mxu0 0.0
    %278 = vmatprep.subr.mxu0 0.0
    %279 = vmatpush2.msra.mxu0 0.0
    %280 = vmatprep.subr.mxu0 0.0
    %281 = vmatpush2.msra.mxu0 0.0
    %282 = vmatprep.subr.mxu0 0.0
    %283 = vmatpush2.msra.mxu0 0.0
    %284 = vmatprep.subr.mxu0 0.0
    %285 = vmatpush2.msra.mxu0 0.0
    %286 = vmatprep.subr.mxu0 0.0
    %287 = vmatpush2.msra.mxu0 0.0
    %288 = vmatprep.subr.mxu0 0.0
    %289 = vmatpush2.msra.mxu0 0.0
    %290 = vmatprep.mubr.f32.mxu0 0.0
    %291 = vmatmul.mubr.f32.gmra.mxu0 %v224
    %v292 = vpop.f32.mrf.mxu0
    %v293 = vadd.f32 0.0, %v292
    %v294 = vpop.f32.mrf.mxu0
    %295 = vdwg.mxu0
    %v296 = vadd.f32 %v171, %v293
    %v297 = vtanh.pop %v296
    %v299 = vlaneseq
    %v300 = vshrl.u32 %v299, 7
    %v301 = vsub.s32 0, %v300
    %v302 = vrot.slane %v221, %v301
    %v305 = vsel %vm222, %v297, 0
    %307 = vmatprep.subr.mxu0 0.0
    %308 = vmatpush1.msra.mxu0 0.0
    %309 = vmatprep.subr.mxu0 0.0
    %310 = vmatpush1.msra.mxu0 0.0
    %311 = vmatprep.subr.mxu0 0.0
    %312 = vmatpush1.msra.mxu0 0.0
    %313 = vmatprep.subr.mxu0 0.0
    %314 = vmatpush1.msra.mxu0 0.0
    %315 = vmatprep.subr.mxu0 0.0
    %316 = vmatpush1.msra.mxu0 0.0
    %317 = vmatprep.subr.mxu0 0.0
    %318 = vmatpush1.msra.mxu0 0.0
    %319 = vmatprep.subr.mxu0 0.0
    %320 = vmatpush1.msra.mxu0 0.0
    %321 = vmatprep.subr.mxu0 0.0
    %322 = vmatpush1.msra.mxu0 0.0
    %323 = vmatprep.subr.mxu0 0.0
    %324 = vmatpush1.msra.mxu0 0.0
    %325 = vmatprep.subr.mxu0 0.0
    %326 = vmatpush1.msra.mxu0 0.0
    %327 = vmatprep.subr.mxu0 0.0
    %328 = vmatpush1.msra.mxu0 0.0
    %329 = vmatprep.subr.mxu0 0.0
    %330 = vmatpush1.msra.mxu0 0.0
    %331 = vmatprep.subr.mxu0 0.0
    %332 = vmatpush1.msra.mxu0 %v216
    %333 = vmatprep.subr.mxu0 0.0
    %334 = vmatpush1.msra.mxu0 %v215
    %335 = vmatprep.subr.mxu0 0.0
    %336 = vmatpush1.msra.mxu0 %v214
    %337 = vmatprep.subr.mxu0 0.0
    %338 = vmatpush1.msra.mxu0 %v213
    %339 = vmatprep.subr.mxu0 0.0
    %340 = vmatpush2.msra.mxu0 0.0
    %341 = vmatprep.subr.mxu0 0.0
    %342 = vmatpush2.msra.mxu0 0.0
    %343 = vmatprep.subr.mxu0 0.0
    %344 = vmatpush2.msra.mxu0 0.0
    %345 = vmatprep.subr.mxu0 0.0
    %346 = vmatpush2.msra.mxu0 0.0
    %347 = vmatprep.subr.mxu0 0.0
    %348 = vmatpush2.msra.mxu0 0.0
    %349 = vmatprep.subr.mxu0 0.0
    %350 = vmatpush2.msra.mxu0 0.0
    %351 = vmatprep.subr.mxu0 0.0
    %352 = vmatpush2.msra.mxu0 0.0
    %353 = vmatprep.subr.mxu0 0.0
    %354 = vmatpush2.msra.mxu0 0.0
    %355 = vmatprep.subr.mxu0 0.0
    %356 = vmatpush2.msra.mxu0 0.0
    %357 = vmatprep.subr.mxu0 0.0
    %358 = vmatpush2.msra.mxu0 0.0
    %359 = vmatprep.subr.mxu0 0.0
    %360 = vmatpush2.msra.mxu0 0.0
    %361 = vmatprep.subr.mxu0 0.0
    %362 = vmatpush2.msra.mxu0 0.0
    %363 = vmatprep.subr.mxu0 0.0
    %364 = vmatpush2.msra.mxu0 0.0
    %365 = vmatprep.subr.mxu0 0.0
    %366 = vmatpush2.msra.mxu0 0.0
    %367 = vmatprep.subr.mxu0 0.0
    %368 = vmatpush2.msra.mxu0 0.0
    %369 = vmatprep.subr.mxu0 0.0
    %370 = vmatpush2.msra.mxu0 0.0
    %371 = vmatprep.mubr.f32.mxu0 0.0
    %372 = vmatmul.mubr.f32.gmra.mxu0 %v305
    %v373 = vpop.f32.mrf.mxu0
    %v374 = vadd.f32 %v302, %v373
    %v375 = vpop.f32.mrf.mxu0
    %376 = vdwg.mxu0
    %377 = vmatprep.subr.mxu0 0.0
    %378 = vmatpush1.msra.mxu0 0.0
    %379 = vmatprep.subr.mxu0 0.0
    %380 = vmatpush1.msra.mxu0 0.0
    %381 = vmatprep.subr.mxu0 0.0
    %382 = vmatpush1.msra.mxu0 0.0
    %383 = vmatprep.subr.mxu0 0.0
    %384 = vmatpush1.msra.mxu0 0.0
    %385 = vmatprep.subr.mxu0 0.0
    %386 = vmatpush1.msra.mxu0 0.0
    %387 = vmatprep.subr.mxu0 0.0
    %388 = vmatpush1.msra.mxu0 0.0
    %389 = vmatprep.subr.mxu0 0.0
    %390 = vmatpush1.msra.mxu0 0.0
    %391 = vmatprep.subr.mxu0 0.0
    %392 = vmatpush1.msra.mxu0 0.0
    %393 = vmatprep.subr.mxu0 0.0
    %394 = vmatpush1.msra.mxu0 0.0
    %395 = vmatprep.subr.mxu0 0.0
    %396 = vmatpush1.msra.mxu0 0.0
    %397 = vmatprep.subr.mxu0 0.0
    %398 = vmatpush1.msra.mxu0 0.0
    %399 = vmatprep.subr.mxu0 0.0
    %400 = vmatpush1.msra.mxu0 0.0
    %401 = vmatprep.subr.mxu0 0.0
    %402 = vmatpush1.msra.mxu0 %v212
    %403 = vmatprep.subr.mxu0 0.0
    %404 = vmatpush1.msra.mxu0 %v211
    %405 = vmatprep.subr.mxu0 0.0
    %406 = vmatpush1.msra.mxu0 %v210
    %407 = vmatprep.subr.mxu0 0.0
    %408 = vmatpush1.msra.mxu0 %v209
    %409 = vmatprep.subr.mxu0 0.0
    %410 = vmatpush2.msra.mxu0 0.0
    %411 = vmatprep.subr.mxu0 0.0
    %412 = vmatpush2.msra.mxu0 0.0
    %413 = vmatprep.subr.mxu0 0.0
    %414 = vmatpush2.msra.mxu0 0.0
    %415 = vmatprep.subr.mxu0 0.0
    %416 = vmatpush2.msra.mxu0 0.0
    %417 = vmatprep.subr.mxu0 0.0
    %418 = vmatpush2.msra.mxu0 0.0
    %419 = vmatprep.subr.mxu0 0.0
    %420 = vmatpush2.msra.mxu0 0.0
    %421 = vmatprep.subr.mxu0 0.0
    %422 = vmatpush2.msra.mxu0 0.0
    %423 = vmatprep.subr.mxu0 0.0
    %424 = vmatpush2.msra.mxu0 0.0
    %425 = vmatprep.subr.mxu0 0.0
    %426 = vmatpush2.msra.mxu0 0.0
    %427 = vmatprep.subr.mxu0 0.0
    %428 = vmatpush2.msra.mxu0 0.0
    %429 = vmatprep.subr.mxu0 0.0
    %430 = vmatpush2.msra.mxu0 0.0
    %431 = vmatprep.subr.mxu0 0.0
    %432 = vmatpush2.msra.mxu0 0.0
    %433 = vmatprep.subr.mxu0 0.0
    %434 = vmatpush2.msra.mxu0 0.0
    %435 = vmatprep.subr.mxu0 0.0
    %436 = vmatpush2.msra.mxu0 0.0
    %437 = vmatprep.subr.mxu0 0.0
    %438 = vmatpush2.msra.mxu0 0.0
    %439 = vmatprep.subr.mxu0 0.0
    %440 = vmatpush2.msra.mxu0 0.0
    %441 = vmatprep.mubr.f32.mxu0 0.0
    %442 = vmatmul.mubr.f32.gmra.mxu0 %v305
    %v443 = vpop.f32.mrf.mxu0
    %v444 = vadd.f32 0.0, %v443
    %v445 = vpop.f32.mrf.mxu0
    %446 = vdwg.mxu0
    %v447 = vadd.f32 %v176, %v444
    %v448 = vtanh.pop %v447
    %v450 = vsel %vm222, %v448, 0
    %452 = vmatprep.subr.mxu0 0.0
    %453 = vmatpush1.msra.mxu0 0.0
    %454 = vmatprep.subr.mxu0 0.0
    %455 = vmatpush1.msra.mxu0 0.0
    %456 = vmatprep.subr.mxu0 0.0
    %457 = vmatpush1.msra.mxu0 0.0
    %458 = vmatprep.subr.mxu0 0.0
    %459 = vmatpush1.msra.mxu0 0.0
    %460 = vmatprep.subr.mxu0 0.0
    %461 = vmatpush1.msra.mxu0 0.0
    %462 = vmatprep.subr.mxu0 0.0
    %463 = vmatpush1.msra.mxu0 0.0
    %464 = vmatprep.subr.mxu0 0.0
    %465 = vmatpush1.msra.mxu0 0.0
    %466 = vmatprep.subr.mxu0 0.0
    %467 = vmatpush1.msra.mxu0 0.0
    %468 = vmatprep.subr.mxu0 0.0
    %469 = vmatpush1.msra.mxu0 0.0
    %470 = vmatprep.subr.mxu0 0.0
    %471 = vmatpush1.msra.mxu0 0.0
    %472 = vmatprep.subr.mxu0 0.0
    %473 = vmatpush1.msra.mxu0 0.0
    %474 = vmatprep.subr.mxu0 0.0
    %475 = vmatpush1.msra.mxu0 0.0
    %476 = vmatprep.subr.mxu0 0.0
    %477 = vmatpush1.msra.mxu0 %v216
    %478 = vmatprep.subr.mxu0 0.0
    %479 = vmatpush1.msra.mxu0 %v215
    %480 = vmatprep.subr.mxu0 0.0
    %481 = vmatpush1.msra.mxu0 %v214
    %482 = vmatprep.subr.mxu0 0.0
    %483 = vmatpush1.msra.mxu0 %v213
    %484 = vmatprep.subr.mxu0 0.0
    %485 = vmatpush2.msra.mxu0 0.0
    %486 = vmatprep.subr.mxu0 0.0
    %487 = vmatpush2.msra.mxu0 0.0
    %488 = vmatprep.subr.mxu0 0.0
    %489 = vmatpush2.msra.mxu0 0.0
    %490 = vmatprep.subr.mxu0 0.0
    %491 = vmatpush2.msra.mxu0 0.0
    %492 = vmatprep.subr.mxu0 0.0
    %493 = vmatpush2.msra.mxu0 0.0
    %494 = vmatprep.subr.mxu0 0.0
    %495 = vmatpush2.msra.mxu0 0.0
    %496 = vmatprep.subr.mxu0 0.0
    %497 = vmatpush2.msra.mxu0 0.0
    %498 = vmatprep.subr.mxu0 0.0
    %499 = vmatpush2.msra.mxu0 0.0
    %500 = vmatprep.subr.mxu0 0.0
    %501 = vmatpush2.msra.mxu0 0.0
    %502 = vmatprep.subr.mxu0 0.0
    %503 = vmatpush2.msra.mxu0 0.0
    %504 = vmatprep.subr.mxu0 0.0
    %505 = vmatpush2.msra.mxu0 0.0
    %506 = vmatprep.subr.mxu0 0.0
    %507 = vmatpush2.msra.mxu0 0.0
    %508 = vmatprep.subr.mxu0 0.0
    %509 = vmatpush2.msra.mxu0 0.0
    %510 = vmatprep.subr.mxu0 0.0
    %511 = vmatpush2.msra.mxu0 0.0
    %512 = vmatprep.subr.mxu0 0.0
    %513 = vmatpush2.msra.mxu0 0.0
    %514 = vmatprep.subr.mxu0 0.0
    %515 = vmatpush2.msra.mxu0 0.0
    %516 = vmatprep.mubr.f32.mxu0 0.0
    %517 = vmatmul.mubr.f32.gmra.mxu0 %v450
    %v518 = vpop.f32.mrf.mxu0
    %v519 = vadd.f32 %v302, %v518
    %v520 = vpop.f32.mrf.mxu0
    %521 = vdwg.mxu0
    %522 = vmatprep.subr.mxu0 0.0
    %523 = vmatpush1.msra.mxu0 0.0
    %524 = vmatprep.subr.mxu0 0.0
    %525 = vmatpush1.msra.mxu0 0.0
    %526 = vmatprep.subr.mxu0 0.0
    %527 = vmatpush1.msra.mxu0 0.0
    %528 = vmatprep.subr.mxu0 0.0
    %529 = vmatpush1.msra.mxu0 0.0
    %530 = vmatprep.subr.mxu0 0.0
    %531 = vmatpush1.msra.mxu0 0.0
    %532 = vmatprep.subr.mxu0 0.0
    %533 = vmatpush1.msra.mxu0 0.0
    %534 = vmatprep.subr.mxu0 0.0
    %535 = vmatpush1.msra.mxu0 0.0
    %536 = vmatprep.subr.mxu0 0.0
    %537 = vmatpush1.msra.mxu0 0.0
    %538 = vmatprep.subr.mxu0 0.0
    %539 = vmatpush1.msra.mxu0 0.0
    %540 = vmatprep.subr.mxu0 0.0
    %541 = vmatpush1.msra.mxu0 0.0
    %542 = vmatprep.subr.mxu0 0.0
    %543 = vmatpush1.msra.mxu0 0.0
    %544 = vmatprep.subr.mxu0 0.0
    %545 = vmatpush1.msra.mxu0 0.0
    %546 = vmatprep.subr.mxu0 0.0
    %547 = vmatpush1.msra.mxu0 %v212
    %548 = vmatprep.subr.mxu0 0.0
    %549 = vmatpush1.msra.mxu0 %v211
    %550 = vmatprep.subr.mxu0 0.0
    %551 = vmatpush1.msra.mxu0 %v210
    %552 = vmatprep.subr.mxu0 0.0
    %553 = vmatpush1.msra.mxu0 %v209
    %554 = vmatprep.subr.mxu0 0.0
    %555 = vmatpush2.msra.mxu0 0.0
    %556 = vmatprep.subr.mxu0 0.0
    %557 = vmatpush2.msra.mxu0 0.0
    %558 = vmatprep.subr.mxu0 0.0
    %559 = vmatpush2.msra.mxu0 0.0
    %560 = vmatprep.subr.mxu0 0.0
    %561 = vmatpush2.msra.mxu0 0.0
    %562 = vmatprep.subr.mxu0 0.0
    %563 = vmatpush2.msra.mxu0 0.0
    %564 = vmatprep.subr.mxu0 0.0
    %565 = vmatpush2.msra.mxu0 0.0
    %566 = vmatprep.subr.mxu0 0.0
    %567 = vmatpush2.msra.mxu0 0.0
    %568 = vmatprep.subr.mxu0 0.0
    %569 = vmatpush2.msra.mxu0 0.0
    %570 = vmatprep.subr.mxu0 0.0
    %571 = vmatpush2.msra.mxu0 0.0
    %572 = vmatprep.subr.mxu0 0.0
    %573 = vmatpush2.msra.mxu0 0.0
    %574 = vmatprep.subr.mxu0 0.0
    %575 = vmatpush2.msra.mxu0 0.0
    %576 = vmatprep.subr.mxu0 0.0
    %577 = vmatpush2.msra.mxu0 0.0
    %578 = vmatprep.subr.mxu0 0.0
    %579 = vmatpush2.msra.mxu0 0.0
    %580 = vmatprep.subr.mxu0 0.0
    %581 = vmatpush2.msra.mxu0 0.0
    %582 = vmatprep.subr.mxu0 0.0
    %583 = vmatpush2.msra.mxu0 0.0
    %584 = vmatprep.subr.mxu0 0.0
    %585 = vmatpush2.msra.mxu0 0.0
    %586 = vmatprep.mubr.f32.mxu0 0.0
    %587 = vmatmul.mubr.f32.gmra.mxu0 %v450
    %v588 = vpop.f32.mrf.mxu0
    %v589 = vadd.f32 0.0, %v588
    %v590 = vpop.f32.mrf.mxu0
    %591 = vdwg.mxu0
    %v592 = vadd.f32 %v181, %v589
    %v593 = vtanh.pop %v592
    %v595 = vsel %vm222, %v593, 0
    %597 = vmatprep.subr.mxu0 0.0
    %598 = vmatpush1.msra.mxu0 0.0
    %599 = vmatprep.subr.mxu0 0.0
    %600 = vmatpush1.msra.mxu0 0.0
    %601 = vmatprep.subr.mxu0 0.0
    %602 = vmatpush1.msra.mxu0 0.0
    %603 = vmatprep.subr.mxu0 0.0
    %604 = vmatpush1.msra.mxu0 0.0
    %605 = vmatprep.subr.mxu0 0.0
    %606 = vmatpush1.msra.mxu0 0.0
    %607 = vmatprep.subr.mxu0 0.0
    %608 = vmatpush1.msra.mxu0 0.0
    %609 = vmatprep.subr.mxu0 0.0
    %610 = vmatpush1.msra.mxu0 0.0
    %611 = vmatprep.subr.mxu0 0.0
    %612 = vmatpush1.msra.mxu0 0.0
    %613 = vmatprep.subr.mxu0 0.0
    %614 = vmatpush1.msra.mxu0 0.0
    %615 = vmatprep.subr.mxu0 0.0
    %616 = vmatpush1.msra.mxu0 0.0
    %617 = vmatprep.subr.mxu0 0.0
    %618 = vmatpush1.msra.mxu0 0.0
    %619 = vmatprep.subr.mxu0 0.0
    %620 = vmatpush1.msra.mxu0 0.0
    %621 = vmatprep.subr.mxu0 0.0
    %622 = vmatpush1.msra.mxu0 %v216
    %623 = vmatprep.subr.mxu0 0.0
    %624 = vmatpush1.msra.mxu0 %v215
    %625 = vmatprep.subr.mxu0 0.0
    %626 = vmatpush1.msra.mxu0 %v214
    %627 = vmatprep.subr.mxu0 0.0
    %628 = vmatpush1.msra.mxu0 %v213
    %629 = vmatprep.subr.mxu0 0.0
    %630 = vmatpush2.msra.mxu0 0.0
    %631 = vmatprep.subr.mxu0 0.0
    %632 = vmatpush2.msra.mxu0 0.0
    %633 = vmatprep.subr.mxu0 0.0
    %634 = vmatpush2.msra.mxu0 0.0
    %635 = vmatprep.subr.mxu0 0.0
    %636 = vmatpush2.msra.mxu0 0.0
    %637 = vmatprep.subr.mxu0 0.0
    %638 = vmatpush2.msra.mxu0 0.0
    %639 = vmatprep.subr.mxu0 0.0
    %640 = vmatpush2.msra.mxu0 0.0
    %641 = vmatprep.subr.mxu0 0.0
    %642 = vmatpush2.msra.mxu0 0.0
    %643 = vmatprep.subr.mxu0 0.0
    %644 = vmatpush2.msra.mxu0 0.0
    %645 = vmatprep.subr.mxu0 0.0
    %646 = vmatpush2.msra.mxu0 0.0
    %647 = vmatprep.subr.mxu0 0.0
    %648 = vmatpush2.msra.mxu0 0.0
    %649 = vmatprep.subr.mxu0 0.0
    %650 = vmatpush2.msra.mxu0 0.0
    %651 = vmatprep.subr.mxu0 0.0
    %652 = vmatpush2.msra.mxu0 0.0
    %653 = vmatprep.subr.mxu0 0.0
    %654 = vmatpush2.msra.mxu0 0.0
    %655 = vmatprep.subr.mxu0 0.0
    %656 = vmatpush2.msra.mxu0 0.0
    %657 = vmatprep.subr.mxu0 0.0
    %658 = vmatpush2.msra.mxu0 0.0
    %659 = vmatprep.subr.mxu0 0.0
    %660 = vmatpush2.msra.mxu0 0.0
    %661 = vmatprep.mubr.f32.mxu0 0.0
    %662 = vmatmul.mubr.f32.gmra.mxu0 %v595
    %v663 = vpop.f32.mrf.mxu0
    %v664 = vadd.f32 %v302, %v663
    %v665 = vpop.f32.mrf.mxu0
    %666 = vdwg.mxu0
    %667 = vmatprep.subr.mxu0 0.0
    %668 = vmatpush1.msra.mxu0 0.0
    %669 = vmatprep.subr.mxu0 0.0
    %670 = vmatpush1.msra.mxu0 0.0
    %671 = vmatprep.subr.mxu0 0.0
    %672 = vmatpush1.msra.mxu0 0.0
    %673 = vmatprep.subr.mxu0 0.0
    %674 = vmatpush1.msra.mxu0 0.0
    %675 = vmatprep.subr.mxu0 0.0
    %676 = vmatpush1.msra.mxu0 0.0
    %677 = vmatprep.subr.mxu0 0.0
    %678 = vmatpush1.msra.mxu0 0.0
    %679 = vmatprep.subr.mxu0 0.0
    %680 = vmatpush1.msra.mxu0 0.0
    %681 = vmatprep.subr.mxu0 0.0
    %682 = vmatpush1.msra.mxu0 0.0
    %683 = vmatprep.subr.mxu0 0.0
    %684 = vmatpush1.msra.mxu0 0.0
    %685 = vmatprep.subr.mxu0 0.0
    %686 = vmatpush1.msra.mxu0 0.0
    %687 = vmatprep.subr.mxu0 0.0
    %688 = vmatpush1.msra.mxu0 0.0
    %689 = vmatprep.subr.mxu0 0.0
    %690 = vmatpush1.msra.mxu0 0.0
    %691 = vmatprep.subr.mxu0 0.0
    %692 = vmatpush1.msra.mxu0 %v212
    %693 = vmatprep.subr.mxu0 0.0
    %694 = vmatpush1.msra.mxu0 %v211
    %695 = vmatprep.subr.mxu0 0.0
    %696 = vmatpush1.msra.mxu0 %v210
    %697 = vmatprep.subr.mxu0 0.0
    %698 = vmatpush1.msra.mxu0 %v209
    %699 = vmatprep.subr.mxu0 0.0
    %700 = vmatpush2.msra.mxu0 0.0
    %701 = vmatprep.subr.mxu0 0.0
    %702 = vmatpush2.msra.mxu0 0.0
    %703 = vmatprep.subr.mxu0 0.0
    %704 = vmatpush2.msra.mxu0 0.0
    %705 = vmatprep.subr.mxu0 0.0
    %706 = vmatpush2.msra.mxu0 0.0
    %707 = vmatprep.subr.mxu0 0.0
    %708 = vmatpush2.msra.mxu0 0.0
    %709 = vmatprep.subr.mxu0 0.0
    %710 = vmatpush2.msra.mxu0 0.0
    %711 = vmatprep.subr.mxu0 0.0
    %712 = vmatpush2.msra.mxu0 0.0
    %713 = vmatprep.subr.mxu0 0.0
    %714 = vmatpush2.msra.mxu0 0.0
    %715 = vmatprep.subr.mxu0 0.0
    %716 = vmatpush2.msra.mxu0 0.0
    %717 = vmatprep.subr.mxu0 0.0
    %718 = vmatpush2.msra.mxu0 0.0
    %719 = vmatprep.subr.mxu0 0.0
    %720 = vmatpush2.msra.mxu0 0.0
    %721 = vmatprep.subr.mxu0 0.0
    %722 = vmatpush2.msra.mxu0 0.0
    %723 = vmatprep.subr.mxu0 0.0
    %724 = vmatpush2.msra.mxu0 0.0
    %725 = vmatprep.subr.mxu0 0.0
    %726 = vmatpush2.msra.mxu0 0.0
    %727 = vmatprep.subr.mxu0 0.0
    %728 = vmatpush2.msra.mxu0 0.0
    %729 = vmatprep.subr.mxu0 0.0
    %730 = vmatpush2.msra.mxu0 0.0
    %731 = vmatprep.mubr.f32.mxu0 0.0
    %732 = vmatmul.mubr.f32.gmra.mxu0 %v595
    %v733 = vpop.f32.mrf.mxu0
    %v734 = vadd.f32 0.0, %v733
    %v735 = vpop.f32.mrf.mxu0
    %736 = vdwg.mxu0
    %v737 = vadd.f32 %v186, %v734
    %v738 = vtanh.pop %v737
    %v740 = vsel %vm222, %v738, 0
    %742 = vmatprep.subr.mxu0 0.0
    %743 = vmatpush1.msra.mxu0 0.0
    %744 = vmatprep.subr.mxu0 0.0
    %745 = vmatpush1.msra.mxu0 0.0
    %746 = vmatprep.subr.mxu0 0.0
    %747 = vmatpush1.msra.mxu0 0.0
    %748 = vmatprep.subr.mxu0 0.0
    %749 = vmatpush1.msra.mxu0 0.0
    %750 = vmatprep.subr.mxu0 0.0
    %751 = vmatpush1.msra.mxu0 0.0
    %752 = vmatprep.subr.mxu0 0.0
    %753 = vmatpush1.msra.mxu0 0.0
    %754 = vmatprep.subr.mxu0 0.0
    %755 = vmatpush1.msra.mxu0 0.0
    %756 = vmatprep.subr.mxu0 0.0
    %757 = vmatpush1.msra.mxu0 0.0
    %758 = vmatprep.subr.mxu0 0.0
    %759 = vmatpush1.msra.mxu0 0.0
    %760 = vmatprep.subr.mxu0 0.0
    %761 = vmatpush1.msra.mxu0 0.0
    %762 = vmatprep.subr.mxu0 0.0
    %763 = vmatpush1.msra.mxu0 0.0
    %764 = vmatprep.subr.mxu0 0.0
    %765 = vmatpush1.msra.mxu0 0.0
    %766 = vmatprep.subr.mxu0 0.0
    %767 = vmatpush1.msra.mxu0 %v216
    %768 = vmatprep.subr.mxu0 0.0
    %769 = vmatpush1.msra.mxu0 %v215
    %770 = vmatprep.subr.mxu0 0.0
    %771 = vmatpush1.msra.mxu0 %v214
    %772 = vmatprep.subr.mxu0 0.0
    %773 = vmatpush1.msra.mxu0 %v213
    %774 = vmatprep.subr.mxu0 0.0
    %775 = vmatpush2.msra.mxu0 0.0
    %776 = vmatprep.subr.mxu0 0.0
    %777 = vmatpush2.msra.mxu0 0.0
    %778 = vmatprep.subr.mxu0 0.0
    %779 = vmatpush2.msra.mxu0 0.0
    %780 = vmatprep.subr.mxu0 0.0
    %781 = vmatpush2.msra.mxu0 0.0
    %782 = vmatprep.subr.mxu0 0.0
    %783 = vmatpush2.msra.mxu0 0.0
    %784 = vmatprep.subr.mxu0 0.0
    %785 = vmatpush2.msra.mxu0 0.0
    %786 = vmatprep.subr.mxu0 0.0
    %787 = vmatpush2.msra.mxu0 0.0
    %788 = vmatprep.subr.mxu0 0.0
    %789 = vmatpush2.msra.mxu0 0.0
    %790 = vmatprep.subr.mxu0 0.0
    %791 = vmatpush2.msra.mxu0 0.0
    %792 = vmatprep.subr.mxu0 0.0
    %793 = vmatpush2.msra.mxu0 0.0
    %794 = vmatprep.subr.mxu0 0.0
    %795 = vmatpush2.msra.mxu0 0.0
    %796 = vmatprep.subr.mxu0 0.0
    %797 = vmatpush2.msra.mxu0 0.0
    %798 = vmatprep.subr.mxu0 0.0
    %799 = vmatpush2.msra.mxu0 0.0
    %800 = vmatprep.subr.mxu0 0.0
    %801 = vmatpush2.msra.mxu0 0.0
    %802 = vmatprep.subr.mxu0 0.0
    %803 = vmatpush2.msra.mxu0 0.0
    %804 = vmatprep.subr.mxu0 0.0
    %805 = vmatpush2.msra.mxu0 0.0
    %806 = vmatprep.mubr.f32.mxu0 0.0
    %807 = vmatmul.mubr.f32.gmra.mxu0 %v740
    %v808 = vpop.f32.mrf.mxu0
    %v809 = vadd.f32 %v302, %v808
    %v810 = vpop.f32.mrf.mxu0
    %811 = vdwg.mxu0
    %812 = vmatprep.subr.mxu0 0.0
    %813 = vmatpush1.msra.mxu0 0.0
    %814 = vmatprep.subr.mxu0 0.0
    %815 = vmatpush1.msra.mxu0 0.0
    %816 = vmatprep.subr.mxu0 0.0
    %817 = vmatpush1.msra.mxu0 0.0
    %818 = vmatprep.subr.mxu0 0.0
    %819 = vmatpush1.msra.mxu0 0.0
    %820 = vmatprep.subr.mxu0 0.0
    %821 = vmatpush1.msra.mxu0 0.0
    %822 = vmatprep.subr.mxu0 0.0
    %823 = vmatpush1.msra.mxu0 0.0
    %824 = vmatprep.subr.mxu0 0.0
    %825 = vmatpush1.msra.mxu0 0.0
    %826 = vmatprep.subr.mxu0 0.0
    %827 = vmatpush1.msra.mxu0 0.0
    %828 = vmatprep.subr.mxu0 0.0
    %829 = vmatpush1.msra.mxu0 0.0
    %830 = vmatprep.subr.mxu0 0.0
    %831 = vmatpush1.msra.mxu0 0.0
    %832 = vmatprep.subr.mxu0 0.0
    %833 = vmatpush1.msra.mxu0 0.0
    %834 = vmatprep.subr.mxu0 0.0
    %835 = vmatpush1.msra.mxu0 0.0
    %836 = vmatprep.subr.mxu0 0.0
    %837 = vmatpush1.msra.mxu0 %v212
    %838 = vmatprep.subr.mxu0 0.0
    %839 = vmatpush1.msra.mxu0 %v211
    %840 = vmatprep.subr.mxu0 0.0
    %841 = vmatpush1.msra.mxu0 %v210
    %842 = vmatprep.subr.mxu0 0.0
    %843 = vmatpush1.msra.mxu0 %v209
    %844 = vmatprep.subr.mxu0 0.0
    %845 = vmatpush2.msra.mxu0 0.0
    %846 = vmatprep.subr.mxu0 0.0
    %847 = vmatpush2.msra.mxu0 0.0
    %848 = vmatprep.subr.mxu0 0.0
    %849 = vmatpush2.msra.mxu0 0.0
    %850 = vmatprep.subr.mxu0 0.0
    %851 = vmatpush2.msra.mxu0 0.0
    %852 = vmatprep.subr.mxu0 0.0
    %853 = vmatpush2.msra.mxu0 0.0
    %854 = vmatprep.subr.mxu0 0.0
    %855 = vmatpush2.msra.mxu0 0.0
    %856 = vmatprep.subr.mxu0 0.0
    %857 = vmatpush2.msra.mxu0 0.0
    %858 = vmatprep.subr.mxu0 0.0
    %859 = vmatpush2.msra.mxu0 0.0
    %860 = vmatprep.subr.mxu0 0.0
    %861 = vmatpush2.msra.mxu0 0.0
    %862 = vmatprep.subr.mxu0 0.0
    %863 = vmatpush2.msra.mxu0 0.0
    %864 = vmatprep.subr.mxu0 0.0
    %865 = vmatpush2.msra.mxu0 0.0
    %866 = vmatprep.subr.mxu0 0.0
    %867 = vmatpush2.msra.mxu0 0.0
    %868 = vmatprep.subr.mxu0 0.0
    %869 = vmatpush2.msra.mxu0 0.0
    %870 = vmatprep.subr.mxu0 0.0
    %871 = vmatpush2.msra.mxu0 0.0
    %872 = vmatprep.subr.mxu0 0.0
    %873 = vmatpush2.msra.mxu0 0.0
    %874 = vmatprep.subr.mxu0 0.0
    %875 = vmatpush2.msra.mxu0 0.0
    %876 = vmatprep.mubr.f32.mxu0 0.0
    %877 = vmatmul.mubr.f32.gmra.mxu0 %v740
    %v878 = vpop.f32.mrf.mxu0
    %v879 = vadd.f32 0.0, %v878
    %v880 = vpop.f32.mrf.mxu0
    %881 = vdwg.mxu0
    %v882 = vadd.f32 %v191, %v879
    %v883 = vtanh.pop %v882
    %v885 = vsel %vm222, %v883, 0
    %887 = vmatprep.subr.mxu0 0.0
    %888 = vmatpush1.msra.mxu0 0.0
    %889 = vmatprep.subr.mxu0 0.0
    %890 = vmatpush1.msra.mxu0 0.0
    %891 = vmatprep.subr.mxu0 0.0
    %892 = vmatpush1.msra.mxu0 0.0
    %893 = vmatprep.subr.mxu0 0.0
    %894 = vmatpush1.msra.mxu0 0.0
    %895 = vmatprep.subr.mxu0 0.0
    %896 = vmatpush1.msra.mxu0 0.0
    %897 = vmatprep.subr.mxu0 0.0
    %898 = vmatpush1.msra.mxu0 0.0
    %899 = vmatprep.subr.mxu0 0.0
    %900 = vmatpush1.msra.mxu0 0.0
    %901 = vmatprep.subr.mxu0 0.0
    %902 = vmatpush1.msra.mxu0 0.0
    %903 = vmatprep.subr.mxu0 0.0
    %904 = vmatpush1.msra.mxu0 0.0
    %905 = vmatprep.subr.mxu0 0.0
    %906 = vmatpush1.msra.mxu0 0.0
    %907 = vmatprep.subr.mxu0 0.0
    %908 = vmatpush1.msra.mxu0 0.0
    %909 = vmatprep.subr.mxu0 0.0
    %910 = vmatpush1.msra.mxu0 0.0
    %911 = vmatprep.subr.mxu0 0.0
    %912 = vmatpush1.msra.mxu0 %v216
    %913 = vmatprep.subr.mxu0 0.0
    %914 = vmatpush1.msra.mxu0 %v215
    %915 = vmatprep.subr.mxu0 0.0
    %916 = vmatpush1.msra.mxu0 %v214
    %917 = vmatprep.subr.mxu0 0.0
    %918 = vmatpush1.msra.mxu0 %v213
    %919 = vmatprep.subr.mxu0 0.0
    %920 = vmatpush2.msra.mxu0 0.0
    %921 = vmatprep.subr.mxu0 0.0
    %922 = vmatpush2.msra.mxu0 0.0
    %923 = vmatprep.subr.mxu0 0.0
    %924 = vmatpush2.msra.mxu0 0.0
    %925 = vmatprep.subr.mxu0 0.0
    %926 = vmatpush2.msra.mxu0 0.0
    %927 = vmatprep.subr.mxu0 0.0
    %928 = vmatpush2.msra.mxu0 0.0
    %929 = vmatprep.subr.mxu0 0.0
    %930 = vmatpush2.msra.mxu0 0.0
    %931 = vmatprep.subr.mxu0 0.0
    %932 = vmatpush2.msra.mxu0 0.0
    %933 = vmatprep.subr.mxu0 0.0
    %934 = vmatpush2.msra.mxu0 0.0
    %935 = vmatprep.subr.mxu0 0.0
    %936 = vmatpush2.msra.mxu0 0.0
    %937 = vmatprep.subr.mxu0 0.0
    %938 = vmatpush2.msra.mxu0 0.0
    %939 = vmatprep.subr.mxu0 0.0
    %940 = vmatpush2.msra.mxu0 0.0
    %941 = vmatprep.subr.mxu0 0.0
    %942 = vmatpush2.msra.mxu0 0.0
    %943 = vmatprep.subr.mxu0 0.0
    %944 = vmatpush2.msra.mxu0 0.0
    %945 = vmatprep.subr.mxu0 0.0
    %946 = vmatpush2.msra.mxu0 0.0
    %947 = vmatprep.subr.mxu0 0.0
    %948 = vmatpush2.msra.mxu0 0.0
    %949 = vmatprep.subr.mxu0 0.0
    %950 = vmatpush2.msra.mxu0 0.0
    %951 = vmatprep.mubr.f32.mxu0 0.0
    %952 = vmatmul.mubr.f32.gmra.mxu0 %v885
    %v953 = vpop.f32.mrf.mxu0
    %v954 = vadd.f32 %v302, %v953
    %v955 = vpop.f32.mrf.mxu0
    %956 = vdwg.mxu0
    %957 = vmatprep.subr.mxu0 0.0
    %958 = vmatpush1.msra.mxu0 0.0
    %959 = vmatprep.subr.mxu0 0.0
    %960 = vmatpush1.msra.mxu0 0.0
    %961 = vmatprep.subr.mxu0 0.0
    %962 = vmatpush1.msra.mxu0 0.0
    %963 = vmatprep.subr.mxu0 0.0
    %964 = vmatpush1.msra.mxu0 0.0
    %965 = vmatprep.subr.mxu0 0.0
    %966 = vmatpush1.msra.mxu0 0.0
    %967 = vmatprep.subr.mxu0 0.0
    %968 = vmatpush1.msra.mxu0 0.0
    %969 = vmatprep.subr.mxu0 0.0
    %970 = vmatpush1.msra.mxu0 0.0
    %971 = vmatprep.subr.mxu0 0.0
    %972 = vmatpush1.msra.mxu0 0.0
    %973 = vmatprep.subr.mxu0 0.0
    %974 = vmatpush1.msra.mxu0 0.0
    %975 = vmatprep.subr.mxu0 0.0
    %976 = vmatpush1.msra.mxu0 0.0
    %977 = vmatprep.subr.mxu0 0.0
    %978 = vmatpush1.msra.mxu0 0.0
    %979 = vmatprep.subr.mxu0 0.0
    %980 = vmatpush1.msra.mxu0 0.0
    %981 = vmatprep.subr.mxu0 0.0
    %982 = vmatpush1.msra.mxu0 %v212
    %983 = vmatprep.subr.mxu0 0.0
    %984 = vmatpush1.msra.mxu0 %v211
    %985 = vmatprep.subr.mxu0 0.0
    %986 = vmatpush1.msra.mxu0 %v210
    %987 = vmatprep.subr.mxu0 0.0
    %988 = vmatpush1.msra.mxu0 %v209
    %989 = vmatprep.subr.mxu0 0.0
    %990 = vmatpush2.msra.mxu0 0.0
    %991 = vmatprep.subr.mxu0 0.0
    %992 = vmatpush2.msra.mxu0 0.0
    %993 = vmatprep.subr.mxu0 0.0
    %994 = vmatpush2.msra.mxu0 0.0
    %995 = vmatprep.subr.mxu0 0.0
    %996 = vmatpush2.msra.mxu0 0.0
    %997 = vmatprep.subr.mxu0 0.0
    %998 = vmatpush2.msra.mxu0 0.0
    %999 = vmatprep.subr.mxu0 0.0
    %1000 = vmatpush2.msra.mxu0 0.0
    %1001 = vmatprep.subr.mxu0 0.0
    %1002 = vmatpush2.msra.mxu0 0.0
    %1003 = vmatprep.subr.mxu0 0.0
    %1004 = vmatpush2.msra.mxu0 0.0
    %1005 = vmatprep.subr.mxu0 0.0
    %1006 = vmatpush2.msra.mxu0 0.0
    %1007 = vmatprep.subr.mxu0 0.0
    %1008 = vmatpush2.msra.mxu0 0.0
    %1009 = vmatprep.subr.mxu0 0.0
    %1010 = vmatpush2.msra.mxu0 0.0
    %1011 = vmatprep.subr.mxu0 0.0
    %1012 = vmatpush2.msra.mxu0 0.0
    %1013 = vmatprep.subr.mxu0 0.0
    %1014 = vmatpush2.msra.mxu0 0.0
    %1015 = vmatprep.subr.mxu0 0.0
    %1016 = vmatpush2.msra.mxu0 0.0
    %1017 = vmatprep.subr.mxu0 0.0
    %1018 = vmatpush2.msra.mxu0 0.0
    %1019 = vmatprep.subr.mxu0 0.0
    %1020 = vmatpush2.msra.mxu0 0.0
    %1021 = vmatprep.mubr.f32.mxu0 0.0
    %1022 = vmatmul.mubr.f32.gmra.mxu0 %v885
    %v1023 = vpop.f32.mrf.mxu0
    %v1024 = vadd.f32 0.0, %v1023
    %v1025 = vpop.f32.mrf.mxu0
    %1026 = vdwg.mxu0
    %v1027 = vadd.f32 %v196, %v1024
    %v1028 = vtanh.pop %v1027
    %v1030 = vsel %vm222, %v1028, 0
    %1032 = vmatprep.subr.mxu0 0.0
    %1033 = vmatpush1.msra.mxu0 0.0
    %1034 = vmatprep.subr.mxu0 0.0
    %1035 = vmatpush1.msra.mxu0 0.0
    %1036 = vmatprep.subr.mxu0 0.0
    %1037 = vmatpush1.msra.mxu0 0.0
    %1038 = vmatprep.subr.mxu0 0.0
    %1039 = vmatpush1.msra.mxu0 0.0
    %1040 = vmatprep.subr.mxu0 0.0
    %1041 = vmatpush1.msra.mxu0 0.0
    %1042 = vmatprep.subr.mxu0 0.0
    %1043 = vmatpush1.msra.mxu0 0.0
    %1044 = vmatprep.subr.mxu0 0.0
    %1045 = vmatpush1.msra.mxu0 0.0
    %1046 = vmatprep.subr.mxu0 0.0
    %1047 = vmatpush1.msra.mxu0 0.0
    %1048 = vmatprep.subr.mxu0 0.0
    %1049 = vmatpush1.msra.mxu0 0.0
    %1050 = vmatprep.subr.mxu0 0.0
    %1051 = vmatpush1.msra.mxu0 0.0
    %1052 = vmatprep.subr.mxu0 0.0
    %1053 = vmatpush1.msra.mxu0 0.0
    %1054 = vmatprep.subr.mxu0 0.0
    %1055 = vmatpush1.msra.mxu0 0.0
    %1056 = vmatprep.subr.mxu0 0.0
    %1057 = vmatpush1.msra.mxu0 %v216
    %1058 = vmatprep.subr.mxu0 0.0
    %1059 = vmatpush1.msra.mxu0 %v215
    %1060 = vmatprep.subr.mxu0 0.0
    %1061 = vmatpush1.msra.mxu0 %v214
    %1062 = vmatprep.subr.mxu0 0.0
    %1063 = vmatpush1.msra.mxu0 %v213
    %1064 = vmatprep.subr.mxu0 0.0
    %1065 = vmatpush2.msra.mxu0 0.0
    %1066 = vmatprep.subr.mxu0 0.0
    %1067 = vmatpush2.msra.mxu0 0.0
    %1068 = vmatprep.subr.mxu0 0.0
    %1069 = vmatpush2.msra.mxu0 0.0
    %1070 = vmatprep.subr.mxu0 0.0
    %1071 = vmatpush2.msra.mxu0 0.0
    %1072 = vmatprep.subr.mxu0 0.0
    %1073 = vmatpush2.msra.mxu0 0.0
    %1074 = vmatprep.subr.mxu0 0.0
    %1075 = vmatpush2.msra.mxu0 0.0
    %1076 = vmatprep.subr.mxu0 0.0
    %1077 = vmatpush2.msra.mxu0 0.0
    %1078 = vmatprep.subr.mxu0 0.0
    %1079 = vmatpush2.msra.mxu0 0.0
    %1080 = vmatprep.subr.mxu0 0.0
    %1081 = vmatpush2.msra.mxu0 0.0
    %1082 = vmatprep.subr.mxu0 0.0
    %1083 = vmatpush2.msra.mxu0 0.0
    %1084 = vmatprep.subr.mxu0 0.0
    %1085 = vmatpush2.msra.mxu0 0.0
    %1086 = vmatprep.subr.mxu0 0.0
    %1087 = vmatpush2.msra.mxu0 0.0
    %1088 = vmatprep.subr.mxu0 0.0
    %1089 = vmatpush2.msra.mxu0 0.0
    %1090 = vmatprep.subr.mxu0 0.0
    %1091 = vmatpush2.msra.mxu0 0.0
    %1092 = vmatprep.subr.mxu0 0.0
    %1093 = vmatpush2.msra.mxu0 0.0
    %1094 = vmatprep.subr.mxu0 0.0
    %1095 = vmatpush2.msra.mxu0 0.0
    %1096 = vmatprep.mubr.f32.mxu0 0.0
    %1097 = vmatmul.mubr.f32.gmra.mxu0 %v1030
    %v1098 = vpop.f32.mrf.mxu0
    %v1099 = vadd.f32 %v302, %v1098
    %v1100 = vpop.f32.mrf.mxu0
    %1101 = vdwg.mxu0
    %1102 = vmatprep.subr.mxu0 0.0
    %1103 = vmatpush1.msra.mxu0 0.0
    %1104 = vmatprep.subr.mxu0 0.0
    %1105 = vmatpush1.msra.mxu0 0.0
    %1106 = vmatprep.subr.mxu0 0.0
    %1107 = vmatpush1.msra.mxu0 0.0
    %1108 = vmatprep.subr.mxu0 0.0
    %1109 = vmatpush1.msra.mxu0 0.0
    %1110 = vmatprep.subr.mxu0 0.0
    %1111 = vmatpush1.msra.mxu0 0.0
    %1112 = vmatprep.subr.mxu0 0.0
    %1113 = vmatpush1.msra.mxu0 0.0
    %1114 = vmatprep.subr.mxu0 0.0
    %1115 = vmatpush1.msra.mxu0 0.0
    %1116 = vmatprep.subr.mxu0 0.0
    %1117 = vmatpush1.msra.mxu0 0.0
    %1118 = vmatprep.subr.mxu0 0.0
    %1119 = vmatpush1.msra.mxu0 0.0
    %1120 = vmatprep.subr.mxu0 0.0
    %1121 = vmatpush1.msra.mxu0 0.0
    %1122 = vmatprep.subr.mxu0 0.0
    %1123 = vmatpush1.msra.mxu0 0.0
    %1124 = vmatprep.subr.mxu0 0.0
    %1125 = vmatpush1.msra.mxu0 0.0
    %1126 = vmatprep.subr.mxu0 0.0
    %1127 = vmatpush1.msra.mxu0 %v212
    %1128 = vmatprep.subr.mxu0 0.0
    %1129 = vmatpush1.msra.mxu0 %v211
    %1130 = vmatprep.subr.mxu0 0.0
    %1131 = vmatpush1.msra.mxu0 %v210
    %1132 = vmatprep.subr.mxu0 0.0
    %1133 = vmatpush1.msra.mxu0 %v209
    %1134 = vmatprep.subr.mxu0 0.0
    %1135 = vmatpush2.msra.mxu0 0.0
    %1136 = vmatprep.subr.mxu0 0.0
    %1137 = vmatpush2.msra.mxu0 0.0
    %1138 = vmatprep.subr.mxu0 0.0
    %1139 = vmatpush2.msra.mxu0 0.0
    %1140 = vmatprep.subr.mxu0 0.0
    %1141 = vmatpush2.msra.mxu0 0.0
    %1142 = vmatprep.subr.mxu0 0.0
    %1143 = vmatpush2.msra.mxu0 0.0
    %1144 = vmatprep.subr.mxu0 0.0
    %1145 = vmatpush2.msra.mxu0 0.0
    %1146 = vmatprep.subr.mxu0 0.0
    %1147 = vmatpush2.msra.mxu0 0.0
    %1148 = vmatprep.subr.mxu0 0.0
    %1149 = vmatpush2.msra.mxu0 0.0
    %1150 = vmatprep.subr.mxu0 0.0
    %1151 = vmatpush2.msra.mxu0 0.0
    %1152 = vmatprep.subr.mxu0 0.0
    %1153 = vmatpush2.msra.mxu0 0.0
    %1154 = vmatprep.subr.mxu0 0.0
    %1155 = vmatpush2.msra.mxu0 0.0
    %1156 = vmatprep.subr.mxu0 0.0
    %1157 = vmatpush2.msra.mxu0 0.0
    %1158 = vmatprep.subr.mxu0 0.0
    %1159 = vmatpush2.msra.mxu0 0.0
    %1160 = vmatprep.subr.mxu0 0.0
    %1161 = vmatpush2.msra.mxu0 0.0
    %1162 = vmatprep.subr.mxu0 0.0
    %1163 = vmatpush2.msra.mxu0 0.0
    %1164 = vmatprep.subr.mxu0 0.0
    %1165 = vmatpush2.msra.mxu0 0.0
    %1166 = vmatprep.mubr.f32.mxu0 0.0
    %1167 = vmatmul.mubr.f32.gmra.mxu0 %v1030
    %v1168 = vpop.f32.mrf.mxu0
    %v1169 = vadd.f32 0.0, %v1168
    %v1170 = vpop.f32.mrf.mxu0
    %1171 = vdwg.mxu0
    %v1172 = vadd.f32 %v201, %v1169
    %v1173 = vtanh.pop %v1172
    %v1175 = vsel %vm222, %v1173, 0
    %1177 = vmatprep.subr.mxu0 0.0
    %1178 = vmatpush1.msra.mxu0 0.0
    %1179 = vmatprep.subr.mxu0 0.0
    %1180 = vmatpush1.msra.mxu0 0.0
    %1181 = vmatprep.subr.mxu0 0.0
    %1182 = vmatpush1.msra.mxu0 0.0
    %1183 = vmatprep.subr.mxu0 0.0
    %1184 = vmatpush1.msra.mxu0 0.0
    %1185 = vmatprep.subr.mxu0 0.0
    %1186 = vmatpush1.msra.mxu0 0.0
    %1187 = vmatprep.subr.mxu0 0.0
    %1188 = vmatpush1.msra.mxu0 0.0
    %1189 = vmatprep.subr.mxu0 0.0
    %1190 = vmatpush1.msra.mxu0 0.0
    %1191 = vmatprep.subr.mxu0 0.0
    %1192 = vmatpush1.msra.mxu0 0.0
    %1193 = vmatprep.subr.mxu0 0.0
    %1194 = vmatpush1.msra.mxu0 0.0
    %1195 = vmatprep.subr.mxu0 0.0
    %1196 = vmatpush1.msra.mxu0 0.0
    %1197 = vmatprep.subr.mxu0 0.0
    %1198 = vmatpush1.msra.mxu0 0.0
    %1199 = vmatprep.subr.mxu0 0.0
    %1200 = vmatpush1.msra.mxu0 0.0
    %1201 = vmatprep.subr.mxu0 0.0
    %1202 = vmatpush1.msra.mxu0 %v216
    %1203 = vmatprep.subr.mxu0 0.0
    %1204 = vmatpush1.msra.mxu0 %v215
    %1205 = vmatprep.subr.mxu0 0.0
    %1206 = vmatpush1.msra.mxu0 %v214
    %1207 = vmatprep.subr.mxu0 0.0
    %1208 = vmatpush1.msra.mxu0 %v213
    %1209 = vmatprep.subr.mxu0 0.0
    %1210 = vmatpush2.msra.mxu0 0.0
    %1211 = vmatprep.subr.mxu0 0.0
    %1212 = vmatpush2.msra.mxu0 0.0
    %1213 = vmatprep.subr.mxu0 0.0
    %1214 = vmatpush2.msra.mxu0 0.0
    %1215 = vmatprep.subr.mxu0 0.0
    %1216 = vmatpush2.msra.mxu0 0.0
    %1217 = vmatprep.subr.mxu0 0.0
    %1218 = vmatpush2.msra.mxu0 0.0
    %1219 = vmatprep.subr.mxu0 0.0
    %1220 = vmatpush2.msra.mxu0 0.0
    %1221 = vmatprep.subr.mxu0 0.0
    %1222 = vmatpush2.msra.mxu0 0.0
    %1223 = vmatprep.subr.mxu0 0.0
    %1224 = vmatpush2.msra.mxu0 0.0
    %1225 = vmatprep.subr.mxu0 0.0
    %1226 = vmatpush2.msra.mxu0 0.0
    %1227 = vmatprep.subr.mxu0 0.0
    %1228 = vmatpush2.msra.mxu0 0.0
    %1229 = vmatprep.subr.mxu0 0.0
    %1230 = vmatpush2.msra.mxu0 0.0
    %1231 = vmatprep.subr.mxu0 0.0
    %1232 = vmatpush2.msra.mxu0 0.0
    %1233 = vmatprep.subr.mxu0 0.0
    %1234 = vmatpush2.msra.mxu0 0.0
    %1235 = vmatprep.subr.mxu0 0.0
    %1236 = vmatpush2.msra.mxu0 0.0
    %1237 = vmatprep.subr.mxu0 0.0
    %1238 = vmatpush2.msra.mxu0 0.0
    %1239 = vmatprep.subr.mxu0 0.0
    %1240 = vmatpush2.msra.mxu0 0.0
    %1241 = vmatprep.mubr.f32.mxu0 0.0
    %1242 = vmatmul.mubr.f32.gmra.mxu0 %v1175
    %v1243 = vpop.f32.mrf.mxu0
    %v1244 = vadd.f32 %v302, %v1243
    %v1245 = vpop.f32.mrf.mxu0
    %1246 = vdwg.mxu0
    %1247 = vmatprep.subr.mxu0 0.0
    %1248 = vmatpush1.msra.mxu0 0.0
    %1249 = vmatprep.subr.mxu0 0.0
    %1250 = vmatpush1.msra.mxu0 0.0
    %1251 = vmatprep.subr.mxu0 0.0
    %1252 = vmatpush1.msra.mxu0 0.0
    %1253 = vmatprep.subr.mxu0 0.0
    %1254 = vmatpush1.msra.mxu0 0.0
    %1255 = vmatprep.subr.mxu0 0.0
    %1256 = vmatpush1.msra.mxu0 0.0
    %1257 = vmatprep.subr.mxu0 0.0
    %1258 = vmatpush1.msra.mxu0 0.0
    %1259 = vmatprep.subr.mxu0 0.0
    %1260 = vmatpush1.msra.mxu0 0.0
    %1261 = vmatprep.subr.mxu0 0.0
    %1262 = vmatpush1.msra.mxu0 0.0
    %1263 = vmatprep.subr.mxu0 0.0
    %1264 = vmatpush1.msra.mxu0 0.0
    %1265 = vmatprep.subr.mxu0 0.0
    %1266 = vmatpush1.msra.mxu0 0.0
    %1267 = vmatprep.subr.mxu0 0.0
    %1268 = vmatpush1.msra.mxu0 0.0
    %1269 = vmatprep.subr.mxu0 0.0
    %1270 = vmatpush1.msra.mxu0 0.0
    %1271 = vmatprep.subr.mxu0 0.0
    %1272 = vmatpush1.msra.mxu0 %v212
    %1273 = vmatprep.subr.mxu0 0.0
    %1274 = vmatpush1.msra.mxu0 %v211
    %1275 = vmatprep.subr.mxu0 0.0
    %1276 = vmatpush1.msra.mxu0 %v210
    %1277 = vmatprep.subr.mxu0 0.0
    %1278 = vmatpush1.msra.mxu0 %v209
    %1279 = vmatprep.subr.mxu0 0.0
    %1280 = vmatpush2.msra.mxu0 0.0
    %1281 = vmatprep.subr.mxu0 0.0
    %1282 = vmatpush2.msra.mxu0 0.0
    %1283 = vmatprep.subr.mxu0 0.0
    %1284 = vmatpush2.msra.mxu0 0.0
    %1285 = vmatprep.subr.mxu0 0.0
    %1286 = vmatpush2.msra.mxu0 0.0
    %1287 = vmatprep.subr.mxu0 0.0
    %1288 = vmatpush2.msra.mxu0 0.0
    %1289 = vmatprep.subr.mxu0 0.0
    %1290 = vmatpush2.msra.mxu0 0.0
    %1291 = vmatprep.subr.mxu0 0.0
    %1292 = vmatpush2.msra.mxu0 0.0
    %1293 = vmatprep.subr.mxu0 0.0
    %1294 = vmatpush2.msra.mxu0 0.0
    %1295 = vmatprep.subr.mxu0 0.0
    %1296 = vmatpush2.msra.mxu0 0.0
    %1297 = vmatprep.subr.mxu0 0.0
    %1298 = vmatpush2.msra.mxu0 0.0
    %1299 = vmatprep.subr.mxu0 0.0
    %1300 = vmatpush2.msra.mxu0 0.0
    %1301 = vmatprep.subr.mxu0 0.0
    %1302 = vmatpush2.msra.mxu0 0.0
    %1303 = vmatprep.subr.mxu0 0.0
    %1304 = vmatpush2.msra.mxu0 0.0
    %1305 = vmatprep.subr.mxu0 0.0
    %1306 = vmatpush2.msra.mxu0 0.0
    %1307 = vmatprep.subr.mxu0 0.0
    %1308 = vmatpush2.msra.mxu0 0.0
    %1309 = vmatprep.subr.mxu0 0.0
    %1310 = vmatpush2.msra.mxu0 0.0
    %1311 = vmatprep.mubr.f32.mxu0 0.0
    %1312 = vmatmul.mubr.f32.gmra.mxu0 %v1175
    %v1313 = vpop.f32.mrf.mxu0
    %v1314 = vadd.f32 0.0, %v1313
    %v1315 = vpop.f32.mrf.mxu0
    %1316 = vdwg.mxu0
    %v1317 = vadd.f32 %v206, %v1314
    %v1318 = vtanh.pop %v1317
    %v1320 = vsel %vm222, %v1318, 0
    %1322 = vmatprep.subr.mxu0 0.0
    %1323 = vmatpush1.msra.mxu0 0.0
    %1324 = vmatprep.subr.mxu0 0.0
    %1325 = vmatpush1.msra.mxu0 0.0
    %1326 = vmatprep.subr.mxu0 0.0
    %1327 = vmatpush1.msra.mxu0 0.0
    %1328 = vmatprep.subr.mxu0 0.0
    %1329 = vmatpush1.msra.mxu0 0.0
    %1330 = vmatprep.subr.mxu0 0.0
    %1331 = vmatpush1.msra.mxu0 0.0
    %1332 = vmatprep.subr.mxu0 0.0
    %1333 = vmatpush1.msra.mxu0 0.0
    %1334 = vmatprep.subr.mxu0 0.0
    %1335 = vmatpush1.msra.mxu0 0.0
    %1336 = vmatprep.subr.mxu0 0.0
    %1337 = vmatpush1.msra.mxu0 0.0
    %1338 = vmatprep.subr.mxu0 0.0
    %1339 = vmatpush1.msra.mxu0 0.0
    %1340 = vmatprep.subr.mxu0 0.0
    %1341 = vmatpush1.msra.mxu0 0.0
    %1342 = vmatprep.subr.mxu0 0.0
    %1343 = vmatpush1.msra.mxu0 0.0
    %1344 = vmatprep.subr.mxu0 0.0
    %1345 = vmatpush1.msra.mxu0 0.0
    %1346 = vmatprep.subr.mxu0 0.0
    %1347 = vmatpush1.msra.mxu0 %v216
    %1348 = vmatprep.subr.mxu0 0.0
    %1349 = vmatpush1.msra.mxu0 %v215
    %1350 = vmatprep.subr.mxu0 0.0
    %1351 = vmatpush1.msra.mxu0 %v214
    %1352 = vmatprep.subr.mxu0 0.0
    %1353 = vmatpush1.msra.mxu0 %v213
    %1354 = vmatprep.subr.mxu0 0.0
    %1355 = vmatpush2.msra.mxu0 0.0
    %1356 = vmatprep.subr.mxu0 0.0
    %1357 = vmatpush2.msra.mxu0 0.0
    %1358 = vmatprep.subr.mxu0 0.0
    %1359 = vmatpush2.msra.mxu0 0.0
    %1360 = vmatprep.subr.mxu0 0.0
    %1361 = vmatpush2.msra.mxu0 0.0
    %1362 = vmatprep.subr.mxu0 0.0
    %1363 = vmatpush2.msra.mxu0 0.0
    %1364 = vmatprep.subr.mxu0 0.0
    %1365 = vmatpush2.msra.mxu0 0.0
    %1366 = vmatprep.subr.mxu0 0.0
    %1367 = vmatpush2.msra.mxu0 0.0
    %1368 = vmatprep.subr.mxu0 0.0
    %1369 = vmatpush2.msra.mxu0 0.0
    %1370 = vmatprep.subr.mxu0 0.0
    %1371 = vmatpush2.msra.mxu0 0.0
    %1372 = vmatprep.subr.mxu0 0.0
    %1373 = vmatpush2.msra.mxu0 0.0
    %1374 = vmatprep.subr.mxu0 0.0
    %1375 = vmatpush2.msra.mxu0 0.0
    %1376 = vmatprep.subr.mxu0 0.0
    %1377 = vmatpush2.msra.mxu0 0.0
    %1378 = vmatprep.subr.mxu0 0.0
    %1379 = vmatpush2.msra.mxu0 0.0
    %1380 = vmatprep.subr.mxu0 0.0
    %1381 = vmatpush2.msra.mxu0 0.0
    %1382 = vmatprep.subr.mxu0 0.0
    %1383 = vmatpush2.msra.mxu0 0.0
    %1384 = vmatprep.subr.mxu0 0.0
    %1385 = vmatpush2.msra.mxu0 0.0
    %1386 = vmatprep.mubr.f32.mxu0 0.0
    %1387 = vmatmul.mubr.f32.gmra.mxu0 %v1320
    %v1388 = vpop.f32.mrf.mxu0
    %v1389 = vadd.f32 %v302, %v1388
    %v1390 = vpop.f32.mrf.mxu0
    %1391 = vdwg.mxu0
    %1392 = vmatprep.subr.mxu0 0.0
    %1393 = vmatpush1.msra.mxu0 0.0
    %1394 = vmatprep.subr.mxu0 0.0
    %1395 = vmatpush1.msra.mxu0 0.0
    %1396 = vmatprep.subr.mxu0 0.0
    %1397 = vmatpush1.msra.mxu0 0.0
    %1398 = vmatprep.subr.mxu0 0.0
    %1399 = vmatpush1.msra.mxu0 0.0
    %1400 = vmatprep.subr.mxu0 0.0
    %1401 = vmatpush1.msra.mxu0 0.0
    %1402 = vmatprep.subr.mxu0 0.0
    %1403 = vmatpush1.msra.mxu0 0.0
    %1404 = vmatprep.subr.mxu0 0.0
    %1405 = vmatpush1.msra.mxu0 0.0
    %1406 = vmatprep.subr.mxu0 0.0
    %1407 = vmatpush1.msra.mxu0 0.0
    %1408 = vmatprep.subr.mxu0 0.0
    %1409 = vmatpush1.msra.mxu0 0.0
    %1410 = vmatprep.subr.mxu0 0.0
    %1411 = vmatpush1.msra.mxu0 0.0
    %1412 = vmatprep.subr.mxu0 0.0
    %1413 = vmatpush1.msra.mxu0 0.0
    %1414 = vmatprep.subr.mxu0 0.0
    %1415 = vmatpush1.msra.mxu0 0.0
    %1416 = vmatprep.subr.mxu0 0.0
    %1417 = vmatpush1.msra.mxu0 %v220
    %1418 = vmatprep.subr.mxu0 0.0
    %1419 = vmatpush1.msra.mxu0 %v219
    %1420 = vmatprep.subr.mxu0 0.0
    %1421 = vmatpush1.msra.mxu0 %v218
    %1422 = vmatprep.subr.mxu0 0.0
    %1423 = vmatpush1.msra.mxu0 %v217
    %1424 = vmatprep.subr.mxu0 0.0
    %1425 = vmatpush2.msra.mxu0 0.0
    %1426 = vmatprep.subr.mxu0 0.0
    %1427 = vmatpush2.msra.mxu0 0.0
    %1428 = vmatprep.subr.mxu0 0.0
    %1429 = vmatpush2.msra.mxu0 0.0
    %1430 = vmatprep.subr.mxu0 0.0
    %1431 = vmatpush2.msra.mxu0 0.0
    %1432 = vmatprep.subr.mxu0 0.0
    %1433 = vmatpush2.msra.mxu0 0.0
    %1434 = vmatprep.subr.mxu0 0.0
    %1435 = vmatpush2.msra.mxu0 0.0
    %1436 = vmatprep.subr.mxu0 0.0
    %1437 = vmatpush2.msra.mxu0 0.0
    %1438 = vmatprep.subr.mxu0 0.0
    %1439 = vmatpush2.msra.mxu0 0.0
    %1440 = vmatprep.subr.mxu0 0.0
    %1441 = vmatpush2.msra.mxu0 0.0
    %1442 = vmatprep.subr.mxu0 0.0
    %1443 = vmatpush2.msra.mxu0 0.0
    %1444 = vmatprep.subr.mxu0 0.0
    %1445 = vmatpush2.msra.mxu0 0.0
    %1446 = vmatprep.subr.mxu0 0.0
    %1447 = vmatpush2.msra.mxu0 0.0
    %1448 = vmatprep.subr.mxu0 0.0
    %1449 = vmatpush2.msra.mxu0 0.0
    %1450 = vmatprep.subr.mxu0 0.0
    %1451 = vmatpush2.msra.mxu0 0.0
    %1452 = vmatprep.subr.mxu0 0.0
    %1453 = vmatpush2.msra.mxu0 0.0
    %1454 = vmatprep.subr.mxu0 0.0
    %1455 = vmatpush2.msra.mxu0 0.0
    %1456 = vmatprep.mubr.f32.mxu0 0.0
    %1457 = vmatmul.mubr.f32.gmra.mxu0 %v224
    %v1458 = vpop.f32.mrf.mxu0
    %v1459 = vadd.f32 0.0, %v1458
    %v1460 = vpop.f32.mrf.mxu0
    %1461 = vdwg.mxu0
    %v1462 = vadd.f32 %v374, %v1459
    %v1463 = vtanh.pop %v1462
    %v1464 = vadd.f32 %v1463, 0.0
    %v1466 = vsel %vm222, %v1463, 0
    %1468 = vmatprep.subr.mxu0 0.0
    %1469 = vmatpush1.msra.mxu0 0.0
    %1470 = vmatprep.subr.mxu0 0.0
    %1471 = vmatpush1.msra.mxu0 0.0
    %1472 = vmatprep.subr.mxu0 0.0
    %1473 = vmatpush1.msra.mxu0 0.0
    %1474 = vmatprep.subr.mxu0 0.0
    %1475 = vmatpush1.msra.mxu0 0.0
    %1476 = vmatprep.subr.mxu0 0.0
    %1477 = vmatpush1.msra.mxu0 0.0
    %1478 = vmatprep.subr.mxu0 0.0
    %1479 = vmatpush1.msra.mxu0 0.0
    %1480 = vmatprep.subr.mxu0 0.0
    %1481 = vmatpush1.msra.mxu0 0.0
    %1482 = vmatprep.subr.mxu0 0.0
    %1483 = vmatpush1.msra.mxu0 0.0
    %1484 = vmatprep.subr.mxu0 0.0
    %1485 = vmatpush1.msra.mxu0 0.0
    %1486 = vmatprep.subr.mxu0 0.0
    %1487 = vmatpush1.msra.mxu0 0.0
    %1488 = vmatprep.subr.mxu0 0.0
    %1489 = vmatpush1.msra.mxu0 0.0
    %1490 = vmatprep.subr.mxu0 0.0
    %1491 = vmatpush1.msra.mxu0 0.0
    %1492 = vmatprep.subr.mxu0 0.0
    %1493 = vmatpush1.msra.mxu0 %v220
    %1494 = vmatprep.subr.mxu0 0.0
    %1495 = vmatpush1.msra.mxu0 %v219
    %1496 = vmatprep.subr.mxu0 0.0
    %1497 = vmatpush1.msra.mxu0 %v218
    %1498 = vmatprep.subr.mxu0 0.0
    %1499 = vmatpush1.msra.mxu0 %v217
    %1500 = vmatprep.subr.mxu0 0.0
    %1501 = vmatpush2.msra.mxu0 0.0
    %1502 = vmatprep.subr.mxu0 0.0
    %1503 = vmatpush2.msra.mxu0 0.0
    %1504 = vmatprep.subr.mxu0 0.0
    %1505 = vmatpush2.msra.mxu0 0.0
    %1506 = vmatprep.subr.mxu0 0.0
    %1507 = vmatpush2.msra.mxu0 0.0
    %1508 = vmatprep.subr.mxu0 0.0
    %1509 = vmatpush2.msra.mxu0 0.0
    %1510 = vmatprep.subr.mxu0 0.0
    %1511 = vmatpush2.msra.mxu0 0.0
    %1512 = vmatprep.subr.mxu0 0.0
    %1513 = vmatpush2.msra.mxu0 0.0
    %1514 = vmatprep.subr.mxu0 0.0
    %1515 = vmatpush2.msra.mxu0 0.0
    %1516 = vmatprep.subr.mxu0 0.0
    %1517 = vmatpush2.msra.mxu0 0.0
    %1518 = vmatprep.subr.mxu0 0.0
    %1519 = vmatpush2.msra.mxu0 0.0
    %1520 = vmatprep.subr.mxu0 0.0
    %1521 = vmatpush2.msra.mxu0 0.0
    %1522 = vmatprep.subr.mxu0 0.0
    %1523 = vmatpush2.msra.mxu0 0.0
    %1524 = vmatprep.subr.mxu0 0.0
    %1525 = vmatpush2.msra.mxu0 0.0
    %1526 = vmatprep.subr.mxu0 0.0
    %1527 = vmatpush2.msra.mxu0 0.0
    %1528 = vmatprep.subr.mxu0 0.0
    %1529 = vmatpush2.msra.mxu0 0.0
    %1530 = vmatprep.subr.mxu0 0.0
    %1531 = vmatpush2.msra.mxu0 0.0
    %1532 = vmatprep.mubr.f32.mxu0 0.0
    %1533 = vmatmul.mubr.f32.gmra.mxu0 %v1466
    %v1534 = vpop.f32.mrf.mxu0
    %v1535 = vadd.f32 0.0, %v1534
    %v1536 = vpop.f32.mrf.mxu0
    %1537 = vdwg.mxu0
    %v1538 = vadd.f32 %v519, %v1535
    %v1539 = vtanh.pop %v1538
    %v1540 = vadd.f32 %v1464, %v1539
    %v1542 = vsel %vm222, %v1539, 0
    %1544 = vmatprep.subr.mxu0 0.0
    %1545 = vmatpush1.msra.mxu0 0.0
    %1546 = vmatprep.subr.mxu0 0.0
    %1547 = vmatpush1.msra.mxu0 0.0
    %1548 = vmatprep.subr.mxu0 0.0
    %1549 = vmatpush1.msra.mxu0 0.0
    %1550 = vmatprep.subr.mxu0 0.0
    %1551 = vmatpush1.msra.mxu0 0.0
    %1552 = vmatprep.subr.mxu0 0.0
    %1553 = vmatpush1.msra.mxu0 0.0
    %1554 = vmatprep.subr.mxu0 0.0
    %1555 = vmatpush1.msra.mxu0 0.0
    %1556 = vmatprep.subr.mxu0 0.0
    %1557 = vmatpush1.msra.mxu0 0.0
    %1558 = vmatprep.subr.mxu0 0.0
    %1559 = vmatpush1.msra.mxu0 0.0
    %1560 = vmatprep.subr.mxu0 0.0
    %1561 = vmatpush1.msra.mxu0 0.0
    %1562 = vmatprep.subr.mxu0 0.0
    %1563 = vmatpush1.msra.mxu0 0.0
    %1564 = vmatprep.subr.mxu0 0.0
    %1565 = vmatpush1.msra.mxu0 0.0
    %1566 = vmatprep.subr.mxu0 0.0
    %1567 = vmatpush1.msra.mxu0 0.0
    %1568 = vmatprep.subr.mxu0 0.0
    %1569 = vmatpush1.msra.mxu0 %v220
    %1570 = vmatprep.subr.mxu0 0.0
    %1571 = vmatpush1.msra.mxu0 %v219
    %1572 = vmatprep.subr.mxu0 0.0
    %1573 = vmatpush1.msra.mxu0 %v218
    %1574 = vmatprep.subr.mxu0 0.0
    %1575 = vmatpush1.msra.mxu0 %v217
    %1576 = vmatprep.subr.mxu0 0.0
    %1577 = vmatpush2.msra.mxu0 0.0
    %1578 = vmatprep.subr.mxu0 0.0
    %1579 = vmatpush2.msra.mxu0 0.0
    %1580 = vmatprep.subr.mxu0 0.0
    %1581 = vmatpush2.msra.mxu0 0.0
    %1582 = vmatprep.subr.mxu0 0.0
    %1583 = vmatpush2.msra.mxu0 0.0
    %1584 = vmatprep.subr.mxu0 0.0
    %1585 = vmatpush2.msra.mxu0 0.0
    %1586 = vmatprep.subr.mxu0 0.0
    %1587 = vmatpush2.msra.mxu0 0.0
    %1588 = vmatprep.subr.mxu0 0.0
    %1589 = vmatpush2.msra.mxu0 0.0
    %1590 = vmatprep.subr.mxu0 0.0
    %1591 = vmatpush2.msra.mxu0 0.0
    %1592 = vmatprep.subr.mxu0 0.0
    %1593 = vmatpush2.msra.mxu0 0.0
    %1594 = vmatprep.subr.mxu0 0.0
    %1595 = vmatpush2.msra.mxu0 0.0
    %1596 = vmatprep.subr.mxu0 0.0
    %1597 = vmatpush2.msra.mxu0 0.0
    %1598 = vmatprep.subr.mxu0 0.0
    %1599 = vmatpush2.msra.mxu0 0.0
    %1600 = vmatprep.subr.mxu0 0.0
    %1601 = vmatpush2.msra.mxu0 0.0
    %1602 = vmatprep.subr.mxu0 0.0
    %1603 = vmatpush2.msra.mxu0 0.0
    %1604 = vmatprep.subr.mxu0 0.0
    %1605 = vmatpush2.msra.mxu0 0.0
    %1606 = vmatprep.subr.mxu0 0.0
    %1607 = vmatpush2.msra.mxu0 0.0
    %1608 = vmatprep.mubr.f32.mxu0 0.0
    %1609 = vmatmul.mubr.f32.gmra.mxu0 %v1542
    %v1610 = vpop.f32.mrf.mxu0
    %v1611 = vadd.f32 0.0, %v1610
    %v1612 = vpop.f32.mrf.mxu0
    %1613 = vdwg.mxu0
    %v1614 = vadd.f32 %v664, %v1611
    %v1615 = vtanh.pop %v1614
    %v1616 = vadd.f32 %v1540, %v1615
    %v1618 = vsel %vm222, %v1615, 0
    %1620 = vmatprep.subr.mxu0 0.0
    %1621 = vmatpush1.msra.mxu0 0.0
    %1622 = vmatprep.subr.mxu0 0.0
    %1623 = vmatpush1.msra.mxu0 0.0
    %1624 = vmatprep.subr.mxu0 0.0
    %1625 = vmatpush1.msra.mxu0 0.0
    %1626 = vmatprep.subr.mxu0 0.0
    %1627 = vmatpush1.msra.mxu0 0.0
    %1628 = vmatprep.subr.mxu0 0.0
    %1629 = vmatpush1.msra.mxu0 0.0
    %1630 = vmatprep.subr.mxu0 0.0
    %1631 = vmatpush1.msra.mxu0 0.0
    %1632 = vmatprep.subr.mxu0 0.0
    %1633 = vmatpush1.msra.mxu0 0.0
    %1634 = vmatprep.subr.mxu0 0.0
    %1635 = vmatpush1.msra.mxu0 0.0
    %1636 = vmatprep.subr.mxu0 0.0
    %1637 = vmatpush1.msra.mxu0 0.0
    %1638 = vmatprep.subr.mxu0 0.0
    %1639 = vmatpush1.msra.mxu0 0.0
    %1640 = vmatprep.subr.mxu0 0.0
    %1641 = vmatpush1.msra.mxu0 0.0
    %1642 = vmatprep.subr.mxu0 0.0
    %1643 = vmatpush1.msra.mxu0 0.0
    %1644 = vmatprep.subr.mxu0 0.0
    %1645 = vmatpush1.msra.mxu0 %v220
    %1646 = vmatprep.subr.mxu0 0.0
    %1647 = vmatpush1.msra.mxu0 %v219
    %1648 = vmatprep.subr.mxu0 0.0
    %1649 = vmatpush1.msra.mxu0 %v218
    %1650 = vmatprep.subr.mxu0 0.0
    %1651 = vmatpush1.msra.mxu0 %v217
    %1652 = vmatprep.subr.mxu0 0.0
    %1653 = vmatpush2.msra.mxu0 0.0
    %1654 = vmatprep.subr.mxu0 0.0
    %1655 = vmatpush2.msra.mxu0 0.0
    %1656 = vmatprep.subr.mxu0 0.0
    %1657 = vmatpush2.msra.mxu0 0.0
    %1658 = vmatprep.subr.mxu0 0.0
    %1659 = vmatpush2.msra.mxu0 0.0
    %1660 = vmatprep.subr.mxu0 0.0
    %1661 = vmatpush2.msra.mxu0 0.0
    %1662 = vmatprep.subr.mxu0 0.0
    %1663 = vmatpush2.msra.mxu0 0.0
    %1664 = vmatprep.subr.mxu0 0.0
    %1665 = vmatpush2.msra.mxu0 0.0
    %1666 = vmatprep.subr.mxu0 0.0
    %1667 = vmatpush2.msra.mxu0 0.0
    %1668 = vmatprep.subr.mxu0 0.0
    %1669 = vmatpush2.msra.mxu0 0.0
    %1670 = vmatprep.subr.mxu0 0.0
    %1671 = vmatpush2.msra.mxu0 0.0
    %1672 = vmatprep.subr.mxu0 0.0
    %1673 = vmatpush2.msra.mxu0 0.0
    %1674 = vmatprep.subr.mxu0 0.0
    %1675 = vmatpush2.msra.mxu0 0.0
    %1676 = vmatprep.subr.mxu0 0.0
    %1677 = vmatpush2.msra.mxu0 0.0
    %1678 = vmatprep.subr.mxu0 0.0
    %1679 = vmatpush2.msra.mxu0 0.0
    %1680 = vmatprep.subr.mxu0 0.0
    %1681 = vmatpush2.msra.mxu0 0.0
    %1682 = vmatprep.subr.mxu0 0.0
    %1683 = vmatpush2.msra.mxu0 0.0
    %1684 = vmatprep.mubr.f32.mxu0 0.0
    %1685 = vmatmul.mubr.f32.gmra.mxu0 %v1618
    %v1686 = vpop.f32.mrf.mxu0
    %v1687 = vadd.f32 0.0, %v1686
    %v1688 = vpop.f32.mrf.mxu0
    %1689 = vdwg.mxu0
    %v1690 = vadd.f32 %v809, %v1687
    %v1691 = vtanh.pop %v1690
    %v1692 = vadd.f32 %v1616, %v1691
    %v1694 = vsel %vm222, %v1691, 0
    %1696 = vmatprep.subr.mxu0 0.0
    %1697 = vmatpush1.msra.mxu0 0.0
    %1698 = vmatprep.subr.mxu0 0.0
    %1699 = vmatpush1.msra.mxu0 0.0
    %1700 = vmatprep.subr.mxu0 0.0
    %1701 = vmatpush1.msra.mxu0 0.0
    %1702 = vmatprep.subr.mxu0 0.0
    %1703 = vmatpush1.msra.mxu0 0.0
    %1704 = vmatprep.subr.mxu0 0.0
    %1705 = vmatpush1.msra.mxu0 0.0
    %1706 = vmatprep.subr.mxu0 0.0
    %1707 = vmatpush1.msra.mxu0 0.0
    %1708 = vmatprep.subr.mxu0 0.0
    %1709 = vmatpush1.msra.mxu0 0.0
    %1710 = vmatprep.subr.mxu0 0.0
    %1711 = vmatpush1.msra.mxu0 0.0
    %1712 = vmatprep.subr.mxu0 0.0
    %1713 = vmatpush1.msra.mxu0 0.0
    %1714 = vmatprep.subr.mxu0 0.0
    %1715 = vmatpush1.msra.mxu0 0.0
    %1716 = vmatprep.subr.mxu0 0.0
    %1717 = vmatpush1.msra.mxu0 0.0
    %1718 = vmatprep.subr.mxu0 0.0
    %1719 = vmatpush1.msra.mxu0 0.0
    %1720 = vmatprep.subr.mxu0 0.0
    %1721 = vmatpush1.msra.mxu0 %v220
    %1722 = vmatprep.subr.mxu0 0.0
    %1723 = vmatpush1.msra.mxu0 %v219
    %1724 = vmatprep.subr.mxu0 0.0
    %1725 = vmatpush1.msra.mxu0 %v218
    %1726 = vmatprep.subr.mxu0 0.0
    %1727 = vmatpush1.msra.mxu0 %v217
    %1728 = vmatprep.subr.mxu0 0.0
    %1729 = vmatpush2.msra.mxu0 0.0
    %1730 = vmatprep.subr.mxu0 0.0
    %1731 = vmatpush2.msra.mxu0 0.0
    %1732 = vmatprep.subr.mxu0 0.0
    %1733 = vmatpush2.msra.mxu0 0.0
    %1734 = vmatprep.subr.mxu0 0.0
    %1735 = vmatpush2.msra.mxu0 0.0
    %1736 = vmatprep.subr.mxu0 0.0
    %1737 = vmatpush2.msra.mxu0 0.0
    %1738 = vmatprep.subr.mxu0 0.0
    %1739 = vmatpush2.msra.mxu0 0.0
    %1740 = vmatprep.subr.mxu0 0.0
    %1741 = vmatpush2.msra.mxu0 0.0
    %1742 = vmatprep.subr.mxu0 0.0
    %1743 = vmatpush2.msra.mxu0 0.0
    %1744 = vmatprep.subr.mxu0 0.0
    %1745 = vmatpush2.msra.mxu0 0.0
    %1746 = vmatprep.subr.mxu0 0.0
    %1747 = vmatpush2.msra.mxu0 0.0
    %1748 = vmatprep.subr.mxu0 0.0
    %1749 = vmatpush2.msra.mxu0 0.0
    %1750 = vmatprep.subr.mxu0 0.0
    %1751 = vmatpush2.msra.mxu0 0.0
    %1752 = vmatprep.subr.mxu0 0.0
    %1753 = vmatpush2.msra.mxu0 0.0
    %1754 = vmatprep.subr.mxu0 0.0
    %1755 = vmatpush2.msra.mxu0 0.0
    %1756 = vmatprep.subr.mxu0 0.0
    %1757 = vmatpush2.msra.mxu0 0.0
    %1758 = vmatprep.subr.mxu0 0.0
    %1759 = vmatpush2.msra.mxu0 0.0
    %1760 = vmatprep.mubr.f32.mxu0 0.0
    %1761 = vmatmul.mubr.f32.gmra.mxu0 %v1694
    %v1762 = vpop.f32.mrf.mxu0
    %v1763 = vadd.f32 0.0, %v1762
    %v1764 = vpop.f32.mrf.mxu0
    %1765 = vdwg.mxu0
    %v1766 = vadd.f32 %v954, %v1763
    %v1767 = vtanh.pop %v1766
    %v1768 = vadd.f32 %v1692, %v1767
    %v1770 = vsel %vm222, %v1767, 0
    %1772 = vmatprep.subr.mxu0 0.0
    %1773 = vmatpush1.msra.mxu0 0.0
    %1774 = vmatprep.subr.mxu0 0.0
    %1775 = vmatpush1.msra.mxu0 0.0
    %1776 = vmatprep.subr.mxu0 0.0
    %1777 = vmatpush1.msra.mxu0 0.0
    %1778 = vmatprep.subr.mxu0 0.0
    %1779 = vmatpush1.msra.mxu0 0.0
    %1780 = vmatprep.subr.mxu0 0.0
    %1781 = vmatpush1.msra.mxu0 0.0
    %1782 = vmatprep.subr.mxu0 0.0
    %1783 = vmatpush1.msra.mxu0 0.0
    %1784 = vmatprep.subr.mxu0 0.0
    %1785 = vmatpush1.msra.mxu0 0.0
    %1786 = vmatprep.subr.mxu0 0.0
    %1787 = vmatpush1.msra.mxu0 0.0
    %1788 = vmatprep.subr.mxu0 0.0
    %1789 = vmatpush1.msra.mxu0 0.0
    %1790 = vmatprep.subr.mxu0 0.0
    %1791 = vmatpush1.msra.mxu0 0.0
    %1792 = vmatprep.subr.mxu0 0.0
    %1793 = vmatpush1.msra.mxu0 0.0
    %1794 = vmatprep.subr.mxu0 0.0
    %1795 = vmatpush1.msra.mxu0 0.0
    %1796 = vmatprep.subr.mxu0 0.0
    %1797 = vmatpush1.msra.mxu0 %v220
    %1798 = vmatprep.subr.mxu0 0.0
    %1799 = vmatpush1.msra.mxu0 %v219
    %1800 = vmatprep.subr.mxu0 0.0
    %1801 = vmatpush1.msra.mxu0 %v218
    %1802 = vmatprep.subr.mxu0 0.0
    %1803 = vmatpush1.msra.mxu0 %v217
    %1804 = vmatprep.subr.mxu0 0.0
    %1805 = vmatpush2.msra.mxu0 0.0
    %1806 = vmatprep.subr.mxu0 0.0
    %1807 = vmatpush2.msra.mxu0 0.0
    %1808 = vmatprep.subr.mxu0 0.0
    %1809 = vmatpush2.msra.mxu0 0.0
    %1810 = vmatprep.subr.mxu0 0.0
    %1811 = vmatpush2.msra.mxu0 0.0
    %1812 = vmatprep.subr.mxu0 0.0
    %1813 = vmatpush2.msra.mxu0 0.0
    %1814 = vmatprep.subr.mxu0 0.0
    %1815 = vmatpush2.msra.mxu0 0.0
    %1816 = vmatprep.subr.mxu0 0.0
    %1817 = vmatpush2.msra.mxu0 0.0
    %1818 = vmatprep.subr.mxu0 0.0
    %1819 = vmatpush2.msra.mxu0 0.0
    %1820 = vmatprep.subr.mxu0 0.0
    %1821 = vmatpush2.msra.mxu0 0.0
    %1822 = vmatprep.subr.mxu0 0.0
    %1823 = vmatpush2.msra.mxu0 0.0
    %1824 = vmatprep.subr.mxu0 0.0
    %1825 = vmatpush2.msra.mxu0 0.0
    %1826 = vmatprep.subr.mxu0 0.0
    %1827 = vmatpush2.msra.mxu0 0.0
    %1828 = vmatprep.subr.mxu0 0.0
    %1829 = vmatpush2.msra.mxu0 0.0
    %1830 = vmatprep.subr.mxu0 0.0
    %1831 = vmatpush2.msra.mxu0 0.0
    %1832 = vmatprep.subr.mxu0 0.0
    %1833 = vmatpush2.msra.mxu0 0.0
    %1834 = vmatprep.subr.mxu0 0.0
    %1835 = vmatpush2.msra.mxu0 0.0
    %1836 = vmatprep.mubr.f32.mxu0 0.0
    %1837 = vmatmul.mubr.f32.gmra.mxu0 %v1770
    %v1838 = vpop.f32.mrf.mxu0
    %v1839 = vadd.f32 0.0, %v1838
    %v1840 = vpop.f32.mrf.mxu0
    %1841 = vdwg.mxu0
    %v1842 = vadd.f32 %v1099, %v1839
    %v1843 = vtanh.pop %v1842
    %v1844 = vadd.f32 %v1768, %v1843
    %v1846 = vsel %vm222, %v1843, 0
    %1848 = vmatprep.subr.mxu0 0.0
    %1849 = vmatpush1.msra.mxu0 0.0
    %1850 = vmatprep.subr.mxu0 0.0
    %1851 = vmatpush1.msra.mxu0 0.0
    %1852 = vmatprep.subr.mxu0 0.0
    %1853 = vmatpush1.msra.mxu0 0.0
    %1854 = vmatprep.subr.mxu0 0.0
    %1855 = vmatpush1.msra.mxu0 0.0
    %1856 = vmatprep.subr.mxu0 0.0
    %1857 = vmatpush1.msra.mxu0 0.0
    %1858 = vmatprep.subr.mxu0 0.0
    %1859 = vmatpush1.msra.mxu0 0.0
    %1860 = vmatprep.subr.mxu0 0.0
    %1861 = vmatpush1.msra.mxu0 0.0
    %1862 = vmatprep.subr.mxu0 0.0
    %1863 = vmatpush1.msra.mxu0 0.0
    %1864 = vmatprep.subr.mxu0 0.0
    %1865 = vmatpush1.msra.mxu0 0.0
    %1866 = vmatprep.subr.mxu0 0.0
    %1867 = vmatpush1.msra.mxu0 0.0
    %1868 = vmatprep.subr.mxu0 0.0
    %1869 = vmatpush1.msra.mxu0 0.0
    %1870 = vmatprep.subr.mxu0 0.0
    %1871 = vmatpush1.msra.mxu0 0.0
    %1872 = vmatprep.subr.mxu0 0.0
    %1873 = vmatpush1.msra.mxu0 %v220
    %1874 = vmatprep.subr.mxu0 0.0
    %1875 = vmatpush1.msra.mxu0 %v219
    %1876 = vmatprep.subr.mxu0 0.0
    %1877 = vmatpush1.msra.mxu0 %v218
    %1878 = vmatprep.subr.mxu0 0.0
    %1879 = vmatpush1.msra.mxu0 %v217
    %1880 = vmatprep.subr.mxu0 0.0
    %1881 = vmatpush2.msra.mxu0 0.0
    %1882 = vmatprep.subr.mxu0 0.0
    %1883 = vmatpush2.msra.mxu0 0.0
    %1884 = vmatprep.subr.mxu0 0.0
    %1885 = vmatpush2.msra.mxu0 0.0
    %1886 = vmatprep.subr.mxu0 0.0
    %1887 = vmatpush2.msra.mxu0 0.0
    %1888 = vmatprep.subr.mxu0 0.0
    %1889 = vmatpush2.msra.mxu0 0.0
    %1890 = vmatprep.subr.mxu0 0.0
    %1891 = vmatpush2.msra.mxu0 0.0
    %1892 = vmatprep.subr.mxu0 0.0
    %1893 = vmatpush2.msra.mxu0 0.0
    %1894 = vmatprep.subr.mxu0 0.0
    %1895 = vmatpush2.msra.mxu0 0.0
    %1896 = vmatprep.subr.mxu0 0.0
    %1897 = vmatpush2.msra.mxu0 0.0
    %1898 = vmatprep.subr.mxu0 0.0
    %1899 = vmatpush2.msra.mxu0 0.0
    %1900 = vmatprep.subr.mxu0 0.0
    %1901 = vmatpush2.msra.mxu0 0.0
    %1902 = vmatprep.subr.mxu0 0.0
    %1903 = vmatpush2.msra.mxu0 0.0
    %1904 = vmatprep.subr.mxu0 0.0
    %1905 = vmatpush2.msra.mxu0 0.0
    %1906 = vmatprep.subr.mxu0 0.0
    %1907 = vmatpush2.msra.mxu0 0.0
    %1908 = vmatprep.subr.mxu0 0.0
    %1909 = vmatpush2.msra.mxu0 0.0
    %1910 = vmatprep.subr.mxu0 0.0
    %1911 = vmatpush2.msra.mxu0 0.0
    %1912 = vmatprep.mubr.f32.mxu0 0.0
    %1913 = vmatmul.mubr.f32.gmra.mxu0 %v1846
    %v1914 = vpop.f32.mrf.mxu0
    %v1915 = vadd.f32 0.0, %v1914
    %v1916 = vpop.f32.mrf.mxu0
    %1917 = vdwg.mxu0
    %v1918 = vadd.f32 %v1244, %v1915
    %v1919 = vtanh.pop %v1918
    %v1920 = vadd.f32 %v1844, %v1919
    %v1922 = vsel %vm222, %v1919, 0
    %1924 = vmatprep.subr.mxu0 0.0
    %1925 = vmatpush1.msra.mxu0 0.0
    %1926 = vmatprep.subr.mxu0 0.0
    %1927 = vmatpush1.msra.mxu0 0.0
    %1928 = vmatprep.subr.mxu0 0.0
    %1929 = vmatpush1.msra.mxu0 0.0
    %1930 = vmatprep.subr.mxu0 0.0
    %1931 = vmatpush1.msra.mxu0 0.0
    %1932 = vmatprep.subr.mxu0 0.0
    %1933 = vmatpush1.msra.mxu0 0.0
    %1934 = vmatprep.subr.mxu0 0.0
    %1935 = vmatpush1.msra.mxu0 0.0
    %1936 = vmatprep.subr.mxu0 0.0
    %1937 = vmatpush1.msra.mxu0 0.0
    %1938 = vmatprep.subr.mxu0 0.0
    %1939 = vmatpush1.msra.mxu0 0.0
    %1940 = vmatprep.subr.mxu0 0.0
    %1941 = vmatpush1.msra.mxu0 0.0
    %1942 = vmatprep.subr.mxu0 0.0
    %1943 = vmatpush1.msra.mxu0 0.0
    %1944 = vmatprep.subr.mxu0 0.0
    %1945 = vmatpush1.msra.mxu0 0.0
    %1946 = vmatprep.subr.mxu0 0.0
    %1947 = vmatpush1.msra.mxu0 0.0
    %1948 = vmatprep.subr.mxu0 0.0
    %1949 = vmatpush1.msra.mxu0 %v220
    %1950 = vmatprep.subr.mxu0 0.0
    %1951 = vmatpush1.msra.mxu0 %v219
    %1952 = vmatprep.subr.mxu0 0.0
    %1953 = vmatpush1.msra.mxu0 %v218
    %1954 = vmatprep.subr.mxu0 0.0
    %1955 = vmatpush1.msra.mxu0 %v217
    %1956 = vmatprep.subr.mxu0 0.0
    %1957 = vmatpush2.msra.mxu0 0.0
    %1958 = vmatprep.subr.mxu0 0.0
    %1959 = vmatpush2.msra.mxu0 0.0
    %1960 = vmatprep.subr.mxu0 0.0
    %1961 = vmatpush2.msra.mxu0 0.0
    %1962 = vmatprep.subr.mxu0 0.0
    %1963 = vmatpush2.msra.mxu0 0.0
    %1964 = vmatprep.subr.mxu0 0.0
    %1965 = vmatpush2.msra.mxu0 0.0
    %1966 = vmatprep.subr.mxu0 0.0
    %1967 = vmatpush2.msra.mxu0 0.0
    %1968 = vmatprep.subr.mxu0 0.0
    %1969 = vmatpush2.msra.mxu0 0.0
    %1970 = vmatprep.subr.mxu0 0.0
    %1971 = vmatpush2.msra.mxu0 0.0
    %1972 = vmatprep.subr.mxu0 0.0
    %1973 = vmatpush2.msra.mxu0 0.0
    %1974 = vmatprep.subr.mxu0 0.0
    %1975 = vmatpush2.msra.mxu0 0.0
    %1976 = vmatprep.subr.mxu0 0.0
    %1977 = vmatpush2.msra.mxu0 0.0
    %1978 = vmatprep.subr.mxu0 0.0
    %1979 = vmatpush2.msra.mxu0 0.0
    %1980 = vmatprep.subr.mxu0 0.0
    %1981 = vmatpush2.msra.mxu0 0.0
    %1982 = vmatprep.subr.mxu0 0.0
    %1983 = vmatpush2.msra.mxu0 0.0
    %1984 = vmatprep.subr.mxu0 0.0
    %1985 = vmatpush2.msra.mxu0 0.0
    %1986 = vmatprep.subr.mxu0 0.0
    %1987 = vmatpush2.msra.mxu0 0.0
    %1988 = vmatprep.mubr.f32.mxu0 0.0
    %1989 = vmatmul.mubr.f32.gmra.mxu0 %v1922
    %v1990 = vpop.f32.mrf.mxu0
    %v1991 = vadd.f32 0.0, %v1990
    %v1992 = vpop.f32.mrf.mxu0
    %1993 = vdwg.mxu0
    %v1994 = vadd.f32 %v1389, %v1991
    %v1995 = vtanh.pop %v1994
    %v1996 = vadd.f32 %v1920, %v1995
    %v1997 = vmul.f32 %v1996, 0.125
    %v1998 = vld [vmem:[%s6] sm:$0xff]
    %v1999 = vld [vmem:[%s6 + $0x8] sm:$0xff]
    %v2000 = vld [vmem:[%s6 + $0x10] sm:$0xff]
    %v2001 = vld [vmem:[%s6 + $0x18] sm:$0xff]
    %v2002 = vld [vmem:[%s7] sm:$0x1]
    %v2004 = vlaneseq
    %v2005 = vshrl.u32 %v2004, 7
    %v2006 = vsub.s32 0, %v2005
    %v2007 = vrot.slane %v2002, %v2006
    %v2010 = vsel %vm222, %v1997, 0
    %2012 = vmatprep.subr.mxu0 0.0
    %2013 = vmatpush1.msra.mxu0 0.0
    %2014 = vmatprep.subr.mxu0 0.0
    %2015 = vmatpush1.msra.mxu0 0.0
    %2016 = vmatprep.subr.mxu0 0.0
    %2017 = vmatpush1.msra.mxu0 0.0
    %2018 = vmatprep.subr.mxu0 0.0
    %2019 = vmatpush1.msra.mxu0 0.0
    %2020 = vmatprep.subr.mxu0 0.0
    %2021 = vmatpush1.msra.mxu0 0.0
    %2022 = vmatprep.subr.mxu0 0.0
    %2023 = vmatpush1.msra.mxu0 0.0
    %2024 = vmatprep.subr.mxu0 0.0
    %2025 = vmatpush1.msra.mxu0 0.0
    %2026 = vmatprep.subr.mxu0 0.0
    %2027 = vmatpush1.msra.mxu0 0.0
    %2028 = vmatprep.subr.mxu0 0.0
    %2029 = vmatpush1.msra.mxu0 0.0
    %2030 = vmatprep.subr.mxu0 0.0
    %2031 = vmatpush1.msra.mxu0 0.0
    %2032 = vmatprep.subr.mxu0 0.0
    %2033 = vmatpush1.msra.mxu0 0.0
    %2034 = vmatprep.subr.mxu0 0.0
    %2035 = vmatpush1.msra.mxu0 0.0
    %2036 = vmatprep.subr.mxu0 0.0
    %2037 = vmatpush1.msra.mxu0 %v2001
    %2038 = vmatprep.subr.mxu0 0.0
    %2039 = vmatpush1.msra.mxu0 %v2000
    %2040 = vmatprep.subr.mxu0 0.0
    %2041 = vmatpush1.msra.mxu0 %v1999
    %2042 = vmatprep.subr.mxu0 0.0
    %2043 = vmatpush1.msra.mxu0 %v1998
    %2044 = vmatprep.subr.mxu0 0.0
    %2045 = vmatpush2.msra.mxu0 0.0
    %2046 = vmatprep.subr.mxu0 0.0
    %2047 = vmatpush2.msra.mxu0 0.0
    %2048 = vmatprep.subr.mxu0 0.0
    %2049 = vmatpush2.msra.mxu0 0.0
    %2050 = vmatprep.subr.mxu0 0.0
    %2051 = vmatpush2.msra.mxu0 0.0
    %2052 = vmatprep.subr.mxu0 0.0
    %2053 = vmatpush2.msra.mxu0 0.0
    %2054 = vmatprep.subr.mxu0 0.0
    %2055 = vmatpush2.msra.mxu0 0.0
    %2056 = vmatprep.subr.mxu0 0.0
    %2057 = vmatpush2.msra.mxu0 0.0
    %2058 = vmatprep.subr.mxu0 0.0
    %2059 = vmatpush2.msra.mxu0 0.0
    %2060 = vmatprep.subr.mxu0 0.0
    %2061 = vmatpush2.msra.mxu0 0.0
    %2062 = vmatprep.subr.mxu0 0.0
    %2063 = vmatpush2.msra.mxu0 0.0
    %2064 = vmatprep.subr.mxu0 0.0
    %2065 = vmatpush2.msra.mxu0 0.0
    %2066 = vmatprep.subr.mxu0 0.0
    %2067 = vmatpush2.msra.mxu0 0.0
    %2068 = vmatprep.subr.mxu0 0.0
    %2069 = vmatpush2.msra.mxu0 0.0
    %2070 = vmatprep.subr.mxu0 0.0
    %2071 = vmatpush2.msra.mxu0 0.0
    %2072 = vmatprep.subr.mxu0 0.0
    %2073 = vmatpush2.msra.mxu0 0.0
    %2074 = vmatprep.subr.mxu0 0.0
    %2075 = vmatpush2.msra.mxu0 0.0
    %2076 = vmatprep.mubr.f32.mxu0 0.0
    %2077 = vmatmul.mubr.f32.gmra.mxu0 %v2010
    %v2078 = vpop.f32.mrf.mxu0
    %v2079 = vadd.f32 %v2007, %v2078
    %v2080 = vpop.f32.mrf.mxu0
    %2081 = vdwg.mxu0
    %2082 = vst [vmem:[#allocation2] sm:$0xff] %v2079
    // Predicated region
    $region34: #{tpu_custom_call.1} parent=1 // pred_check
      _
    $region35: #{tpu_custom_call.1} parent=1 // pred_check_branch
      %2084 = sbr.rel (0) target = $region37
    $region36: #{tpu_custom_call.1} parent=1 // pred_region
      %s2086 = ssub.s32 128, 128
      %2087 = vsyncadd [#allocation3], %s2086
      %s2089 = sshll.u32 [#allocation2], 4
      %s2090 = int_to_ptr.vmem [resolvable:$true] %s2089
      %2092 = dma.vmem_to_hbm [thread:$0]  %s2090, 128, %s8, [#allocation3]
    $region37: #{tpu_custom_call.1} parent=1 // pred_fallthru
      _
    // Predicated region
    $region38: #{tpu_custom_call.1} parent=1 // pred_check
      _
    $region39: #{tpu_custom_call.1} parent=1 // pred_check_branch
      %2094 = sbr.rel (0) target = $region41
    $region40: #{tpu_custom_call.1} parent=1 // pred_region
      %2095 = dma.done [#allocation3], 128
    $region41: #{tpu_custom_call.1} parent=1 // pred_fallthru
      _
    %2096 = vsyncpa [#allocation3], 1

</llo_original>
